<compile_context>
chip_gen: v6e
topology: v6e:2x2x1
jax: 0.10.0
libtpu: 0.0.40
codegen_flags: <defaults>
</compile_context>

<pallas_src>
import functools
import math

import jax
import jax.numpy as jnp
import numpy as np
from jax.experimental import pallas as pl
from jax.experimental.pallas import tpu as pltpu


# --------------------------------------------------------------------------
# Fused MHA kernel: one block of `block_b` batch elements per grid step.
# --------------------------------------------------------------------------
def mha_kernel(q_in_ref, k_in_ref, v_in_ref,
               wq_ref, bq_ref, wk_ref, bk_ref, wv_ref, bv_ref,
               wo_ref, bo_ref,
               mask_kt_ref, mask_v_ref, ones_blk_ref,
               out_ref, attn_ref,
               *, num_heads, d_k, seq_len, block_b):
    S = seq_len
    D = num_heads * d_k
    M = block_b * S                                   # folded matmul M dimension

    # Fold batch rows into M for the projections: one (M, D) x (D, D) MXU op each.
    xq = q_in_ref[...].reshape(M, D)
    xk = k_in_ref[...].reshape(M, D)
    xv = v_in_ref[...].reshape(M, D)

    # 1/sqrt(d_k) is already folded into wq_t / bq (prepare_params).
    q = jnp.dot(xq, wq_ref[...], preferred_element_type=jnp.float32) + bq_ref[...]
    k = jnp.dot(xk, wk_ref[...], preferred_element_type=jnp.float32) + bk_ref[...]
    v = jnp.dot(xv, wv_ref[...], preferred_element_type=jnp.float32) + bv_ref[...]

    mask_kt = mask_kt_ref[...]    # (D, H*S): 1 where d // d_k == col // S
    mask_v = mask_v_ref[...]      # (H*S, D): transpose of mask_kt
    ones_blk = ones_blk_ref[...]  # (H*S, H*S): 1 where rows/cols share a head group

    ctx_rows = []
    for bb in range(block_b):                         # static unroll (small)
        q_b = q[bb * S:(bb + 1) * S, :]               # (S, D)  static sublane slice
        k_b = k[bb * S:(bb + 1) * S, :]
        v_b = v[bb * S:(bb + 1) * S, :]

        # Block-diagonal K^T operand: (D, H*S).  One full-width MXU matmul
        # produces the lane-dense per-head score slab (S, H*S).
        k_blk = jnp.concatenate([k_b.T] * num_heads, axis=1) * mask_kt
        scores = jnp.dot(q_b, k_blk, preferred_element_type=jnp.float32)   # (S, H*S)

        # Per-head softmax on the lane-dense slab.  Subtracting the GLOBAL row
        # max (a per-row constant) is mathematically identical to per-head max
        # subtraction (softmax is shift-invariant within each head's group) and
        # keeps exp() <= 1.
        m = jnp.max(scores, axis=-1, keepdims=True)
        e = jnp.exp(scores - m)
        # Grouped (per-head) row sums, broadcast back across each head's lanes,
        # via a block-diagonal ones matmul; then an exact reciprocal multiply.
        denom = jnp.dot(e, ones_blk, preferred_element_type=jnp.float32)
        attn = e * pl.reciprocal(denom, approx=False)  # Dropout = identity (eval)

        attn_ref[bb] = attn                            # lane-dense (S, H*S) store

        # Block-diagonal V operand: (H*S, D).  Second full-width MXU matmul
        # directly yields the head-concatenated context (S, D) -- no concat.
        v_blk = jnp.concatenate([v_b] * num_heads, axis=0) * mask_v
        ctx_rows.append(jnp.dot(attn, v_blk, preferred_element_type=jnp.float32))

    ctx = ctx_rows[0] if block_b == 1 else jnp.concatenate(ctx_rows, axis=0)  # (M, D)
    out = jnp.dot(ctx, wo_ref[...], preferred_element_type=jnp.float32) + bo_ref[...]
    out_ref[...] = out.reshape(block_b, S, D)


# --------------------------------------------------------------------------
# Host-side helpers
# --------------------------------------------------------------------------
def _block_masks(num_heads, d_k, seq_len):
    """0/1 block-diagonal masks used to build the fused per-head operands."""
    D = num_heads * d_k
    HS = num_heads * seq_len
    d_head = np.arange(D)[:, None] // d_k             # (D, 1)
    col_head = np.arange(HS)[None, :] // seq_len       # (1, HS)
    mask_kt = (d_head == col_head).astype(np.float32)            # (D, HS)
    mask_v = np.ascontiguousarray(mask_kt.T)                      # (HS, D)
    row_head = np.arange(HS)[:, None] // seq_len
    ones_blk = (row_head == col_head).astype(np.float32)          # (HS, HS)
    return jnp.asarray(mask_kt), jnp.asarray(mask_v), jnp.asarray(ones_blk)


def prepare_params(params, *, num_heads):
    """One-time parameter transform: fold 1/sqrt(d_k) into the Q projection."""
    D = params["wq_t"].shape[0]
    d_k = D // num_heads
    scale = jnp.float32(1.0 / math.sqrt(d_k))
    prepared = dict(params)
    prepared["wq_t"] = params["wq_t"] * scale
    prepared["bq"] = params["bq"] * scale
    return prepared


def interpretable_mha(query, key, value, params, *, num_heads, block_b=None):
    """params must come from prepare_params() (scale folded into w_q / b_q)."""
    B, S, D = query.shape
    assert D % num_heads == 0
    d_k = D // num_heads
    HS = num_heads * S

    if block_b is None:
        # Fold as many batch rows as possible into each step's matmul M dim,
        # but keep >= 2 grid steps when B >= 2 (v7x: 2 TensorCores per chip).
        target = max(1, B // 2)
        block_b = next(bb for bb in range(target, 0, -1) if B % bb == 0)
    assert B % block_b == 0
    n_steps = B // block_b

    mask_kt, mask_v, ones_blk = _block_masks(num_heads, d_k, S)

    kernel = functools.partial(mha_kernel, num_heads=num_heads, d_k=d_k,
                               seq_len=S, block_b=block_b)

    seq_spec = pl.BlockSpec((block_b, S, D), lambda i: (i, 0, 0))
    w_spec = pl.BlockSpec((D, D), lambda i: (0, 0))
    b_spec = pl.BlockSpec((1, D), lambda i: (0, 0))
    mkt_spec = pl.BlockSpec((D, HS), lambda i: (0, 0))
    mv_spec = pl.BlockSpec((HS, D), lambda i: (0, 0))
    ob_spec = pl.BlockSpec((HS, HS), lambda i: (0, 0))

    out, attn_lane = pl.pallas_call(
        kernel,
        out_shape=(jax.ShapeDtypeStruct((B, S, D), jnp.float32),
                   jax.ShapeDtypeStruct((B, S, HS), jnp.float32)),
        grid_spec=pltpu.PrefetchScalarGridSpec(
            num_scalar_prefetch=0,
            grid=(n_steps,),
            in_specs=[seq_spec, seq_spec, seq_spec,
                      w_spec, b_spec,       # w_q, b_q (pre-scaled)
                      w_spec, b_spec,       # w_k, b_k
                      w_spec, b_spec,       # w_v, b_v
                      w_spec, b_spec,       # w_o, b_o
                      mkt_spec, mv_spec, ob_spec],
            out_specs=[pl.BlockSpec((block_b, S, D), lambda i: (i, 0, 0)),
                       pl.BlockSpec((block_b, S, HS), lambda i: (i, 0, 0))],
        ),
        compiler_params=pltpu.CompilerParams(
            dimension_semantics=("parallel",)),        # batch blocks independent
    )(query, key, value,
      params["wq_t"], params["bq"], params["wk_t"], params["bk"],
      params["wv_t"], params["bv"], params["wo_t"], params["bo"],
      mask_kt, mask_v, ones_blk)

    # Lane-dense (B, S, H*S) attention slab -> canonical (B, H, S, S) layout.
    attn = attn_lane.reshape(B, S, num_heads, S).transpose(0, 2, 1, 3)
    return out, attn


# --------------------------------------------------------------------------
# Deterministic synthetic parameters (PyTorch nn.Linear default init)
# --------------------------------------------------------------------------
def init_params(key, d_model):
    D = d_model
    ks = jax.random.split(key, 8)
    bound = 1.0 / np.sqrt(D)
    u = lambda kk, shape: jax.random.uniform(kk, shape, jnp.float32, -bound, bound)
    W_q, b_q = u(ks[0], (D, D)), u(ks[1], (D,))
    W_k, b_k = u(ks[2], (D, D)), u(ks[3], (D,))
    W_v, b_v = u(ks[4], (D, D)), u(ks[5], (D,))
    W_o, b_o = u(ks[6], (D, D)), u(ks[7], (D,))
    return dict(
        wq_t=W_q.T, bq=b_q.reshape(1, D),
        wk_t=W_k.T, bk=b_k.reshape(1, D),
        wv_t=W_v.T, bv=b_v.reshape(1, D),
        wo_t=W_o.T, bo=b_o.reshape(1, D),
    )


# --------------------------------------------------------------------------
# Pure-JAX reference (mirrors the PyTorch forward exactly; uses raw params)
# --------------------------------------------------------------------------
def reference_forward(query, key, value, params, *, num_heads):
    B, S, D = query.shape
    d_k = D // num_heads
    hp = jax.lax.Precision.HIGHEST

    def lin(x, w_t, b):
        return jnp.einsum('bsd,de->bse', x, w_t, precision=hp) + b

    Q = lin(query, params["wq_t"], params["bq"]).reshape(B, S, num_heads, d_k).transpose(0, 2, 1, 3)
    K = lin(key, params["wk_t"], params["bk"]).reshape(B, S, num_heads, d_k).transpose(0, 2, 1, 3)
    V = lin(value, params["wv_t"], params["bv"]).reshape(B, S, num_heads, d_k).transpose(0, 2, 1, 3)

    scores = jnp.einsum('bhqd,bhkd->bhqk', Q, K, precision=hp) / np.sqrt(d_k)
    attn = jax.nn.softmax(scores, axis=-1)               # dropout: identity in eval
    ctx = jnp.einsum('bhqk,bhkd->bhqd', attn, V, precision=hp)
    ctx = ctx.transpose(0, 2, 1, 3).reshape(B, S, D)
    out = lin(ctx, params["wo_t"], params["bo"])
    return out, attn


if __name__ == "__main__":
    # Small shapes consistent with the module: d_model=128, 8 heads (d_k=16).
    B, S, D, H = 2, 16, 128, 8
    key = jax.random.PRNGKey(0)
    kq, kk, kv, kp = jax.random.split(key, 4)
    query = jax.random.normal(kq, (B, S, D), jnp.float32)
    key_in = jax.random.normal(kk, (B, S, D), jnp.float32)
    value = jax.random.normal(kv, (B, S, D), jnp.float32)

    params = init_params(kp, D)
    kernel_params = prepare_params(params, num_heads=H)   # one-time transform

    out, attn = interpretable_mha(query, key_in, value, kernel_params, num_heads=H)
    out, attn = jax.block_until_ready((out, attn))
    assert out.shape == (B, S, D) and out.dtype == jnp.float32
    assert attn.shape == (B, H, S, S) and attn.dtype == jnp.float32

    ref_out, ref_attn = reference_forward(query, key_in, value, params, num_heads=H)
    np.testing.assert_allclose(np.asarray(attn), np.asarray(ref_attn), rtol=2e-4, atol=2e-4)
    np.testing.assert_allclose(np.asarray(out), np.asarray(ref_out), rtol=2e-4, atol=2e-4)
    print("KERNEL_OK")
</pallas_src>

<mosaic_0001>
module attributes {stable_mosaic.version = 11 : i64} {
  func.func @mha_kernel(%arg0: i32, %arg1: memref<1x16x128xf32, #tpu.memory_space<vmem>>, %arg2: memref<1x16x128xf32, #tpu.memory_space<vmem>>, %arg3: memref<1x16x128xf32, #tpu.memory_space<vmem>>, %arg4: memref<128x128xf32, #tpu.memory_space<vmem>>, %arg5: memref<1x128xf32, #tpu.memory_space<vmem>>, %arg6: memref<128x128xf32, #tpu.memory_space<vmem>>, %arg7: memref<1x128xf32, #tpu.memory_space<vmem>>, %arg8: memref<128x128xf32, #tpu.memory_space<vmem>>, %arg9: memref<1x128xf32, #tpu.memory_space<vmem>>, %arg10: memref<128x128xf32, #tpu.memory_space<vmem>>, %arg11: memref<1x128xf32, #tpu.memory_space<vmem>>, %arg12: memref<128x128xf32, #tpu.memory_space<vmem>>, %arg13: memref<128x128xf32, #tpu.memory_space<vmem>>, %arg14: memref<128x128xf32, #tpu.memory_space<vmem>>, %arg15: memref<1x16x128xf32, #tpu.memory_space<vmem>>, %arg16: memref<1x16x128xf32, #tpu.memory_space<vmem>>) attributes {dimension_semantics = [#tpu.dimension_semantics<parallel>], iteration_bounds = array<i64: 2>, scalar_prefetch = 0 : i64, scratch_operands = 0 : i64, tpu.core_type = #tpu.core_type<tc>, window_params = [{transform_indices = @transform_0, window_bounds = array<i64: 1, 16, 128>}, {transform_indices = @transform_1, window_bounds = array<i64: 1, 16, 128>}, {transform_indices = @transform_2, window_bounds = array<i64: 1, 16, 128>}, {pipeline_mode = #tpu.pipeline_mode<synchronous>, transform_indices = @transform_3, window_bounds = array<i64: 128, 128>}, {pipeline_mode = #tpu.pipeline_mode<synchronous>, transform_indices = @transform_4, window_bounds = array<i64: 1, 128>}, {pipeline_mode = #tpu.pipeline_mode<synchronous>, transform_indices = @transform_5, window_bounds = array<i64: 128, 128>}, {pipeline_mode = #tpu.pipeline_mode<synchronous>, transform_indices = @transform_6, window_bounds = array<i64: 1, 128>}, {pipeline_mode = #tpu.pipeline_mode<synchronous>, transform_indices = @transform_7, window_bounds = array<i64: 128, 128>}, {pipeline_mode = #tpu.pipeline_mode<synchronous>, transform_indices = @transform_8, window_bounds = array<i64: 1, 128>}, {pipeline_mode = #tpu.pipeline_mode<synchronous>, transform_indices = @transform_9, window_bounds = array<i64: 128, 128>}, {pipeline_mode = #tpu.pipeline_mode<synchronous>, transform_indices = @transform_10, window_bounds = array<i64: 1, 128>}, {pipeline_mode = #tpu.pipeline_mode<synchronous>, transform_indices = @transform_11, window_bounds = array<i64: 128, 128>}, {pipeline_mode = #tpu.pipeline_mode<synchronous>, transform_indices = @transform_12, window_bounds = array<i64: 128, 128>}, {pipeline_mode = #tpu.pipeline_mode<synchronous>, transform_indices = @transform_13, window_bounds = array<i64: 128, 128>}, {transform_indices = @transform_14, window_bounds = array<i64: 1, 16, 128>}, {transform_indices = @transform_15, window_bounds = array<i64: 1, 16, 128>}]} {
    %c0 = arith.constant 0 : index
    %c0_0 = arith.constant 0 : index
    %c0_1 = arith.constant 0 : index
    %0 = vector.load %arg1[%c0, %c0_0, %c0_1] : memref<1x16x128xf32, #tpu.memory_space<vmem>>, vector<1x16x128xf32>
    %1 = vector.shape_cast %0 : vector<1x16x128xf32> to vector<16x128xf32>
    %c0_2 = arith.constant 0 : index
    %c0_3 = arith.constant 0 : index
    %c0_4 = arith.constant 0 : index
    %2 = vector.load %arg2[%c0_2, %c0_3, %c0_4] : memref<1x16x128xf32, #tpu.memory_space<vmem>>, vector<1x16x128xf32>
    %3 = vector.shape_cast %2 : vector<1x16x128xf32> to vector<16x128xf32>
    %c0_5 = arith.constant 0 : index
    %c0_6 = arith.constant 0 : index
    %c0_7 = arith.constant 0 : index
    %4 = vector.load %arg3[%c0_5, %c0_6, %c0_7] : memref<1x16x128xf32, #tpu.memory_space<vmem>>, vector<1x16x128xf32>
    %5 = vector.shape_cast %4 : vector<1x16x128xf32> to vector<16x128xf32>
    %c0_8 = arith.constant 0 : index
    %c0_9 = arith.constant 0 : index
    %6 = vector.load %arg4[%c0_8, %c0_9] : memref<128x128xf32, #tpu.memory_space<vmem>>, vector<128x128xf32>
    %cst = arith.constant dense<0.000000e+00> : vector<16x128xf32>
    %7 = tpu.matmul %1, %6, %cst {dimension_numbers = #tpu.dot_dimension_numbers<[1], [0], [0], [1], [0, 0, 1, 1], [], []>} : vector<16x128xf32>, vector<128x128xf32>, vector<16x128xf32> -> vector<16x128xf32>
    %c0_10 = arith.constant 0 : index
    %c0_11 = arith.constant 0 : index
    %8 = vector.load %arg5[%c0_10, %c0_11] : memref<1x128xf32, #tpu.memory_space<vmem>>, vector<1x128xf32>
    %9 = vector.broadcast %8 : vector<1x128xf32> to vector<16x128xf32>
    %10 = arith.addf %7, %9 : vector<16x128xf32>
    %c0_12 = arith.constant 0 : index
    %c0_13 = arith.constant 0 : index
    %11 = vector.load %arg6[%c0_12, %c0_13] : memref<128x128xf32, #tpu.memory_space<vmem>>, vector<128x128xf32>
    %cst_14 = arith.constant dense<0.000000e+00> : vector<16x128xf32>
    %12 = tpu.matmul %3, %11, %cst_14 {dimension_numbers = #tpu.dot_dimension_numbers<[1], [0], [0], [1], [0, 0, 1, 1], [], []>} : vector<16x128xf32>, vector<128x128xf32>, vector<16x128xf32> -> vector<16x128xf32>
    %c0_15 = arith.constant 0 : index
    %c0_16 = arith.constant 0 : index
    %13 = vector.load %arg7[%c0_15, %c0_16] : memref<1x128xf32, #tpu.memory_space<vmem>>, vector<1x128xf32>
    %14 = vector.broadcast %13 : vector<1x128xf32> to vector<16x128xf32>
    %15 = arith.addf %12, %14 : vector<16x128xf32>
    %c0_17 = arith.constant 0 : index
    %c0_18 = arith.constant 0 : index
    %16 = vector.load %arg8[%c0_17, %c0_18] : memref<128x128xf32, #tpu.memory_space<vmem>>, vector<128x128xf32>
    %cst_19 = arith.constant dense<0.000000e+00> : vector<16x128xf32>
    %17 = tpu.matmul %5, %16, %cst_19 {dimension_numbers = #tpu.dot_dimension_numbers<[1], [0], [0], [1], [0, 0, 1, 1], [], []>} : vector<16x128xf32>, vector<128x128xf32>, vector<16x128xf32> -> vector<16x128xf32>
    %c0_20 = arith.constant 0 : index
    %c0_21 = arith.constant 0 : index
    %18 = vector.load %arg9[%c0_20, %c0_21] : memref<1x128xf32, #tpu.memory_space<vmem>>, vector<1x128xf32>
    %19 = vector.broadcast %18 : vector<1x128xf32> to vector<16x128xf32>
    %20 = arith.addf %17, %19 : vector<16x128xf32>
    %c0_22 = arith.constant 0 : index
    %c0_23 = arith.constant 0 : index
    %21 = vector.load %arg12[%c0_22, %c0_23] : memref<128x128xf32, #tpu.memory_space<vmem>>, vector<128x128xf32>
    %c0_24 = arith.constant 0 : index
    %c0_25 = arith.constant 0 : index
    %22 = vector.load %arg13[%c0_24, %c0_25] : memref<128x128xf32, #tpu.memory_space<vmem>>, vector<128x128xf32>
    %c0_26 = arith.constant 0 : index
    %c0_27 = arith.constant 0 : index
    %23 = vector.load %arg14[%c0_26, %c0_27] : memref<128x128xf32, #tpu.memory_space<vmem>>, vector<128x128xf32>
    %24 = tpu.transpose %15, [1, 0] : vector<16x128xf32> -> vector<128x16xf32>
    %25 = tpu.concatenate %24, %24, %24, %24, %24, %24, %24, %24 in 1 : vector<128x16xf32>, vector<128x16xf32>, vector<128x16xf32>, vector<128x16xf32>, vector<128x16xf32>, vector<128x16xf32>, vector<128x16xf32>, vector<128x16xf32> -> vector<128x128xf32>
    %26 = arith.mulf %25, %21 : vector<128x128xf32>
    %cst_28 = arith.constant dense<0.000000e+00> : vector<16x128xf32>
    %27 = tpu.matmul %10, %26, %cst_28 {dimension_numbers = #tpu.dot_dimension_numbers<[1], [0], [0], [1], [0, 0, 1, 1], [], []>} : vector<16x128xf32>, vector<128x128xf32>, vector<16x128xf32> -> vector<16x128xf32>
    %cst_29 = arith.constant dense<0xFF800000> : vector<16xf32>
    %28 = vector.multi_reduction <maximumf>, %27, %cst_29 [1] : vector<16x128xf32> to vector<16xf32>
    %29 = vector.shape_cast %28 : vector<16xf32> to vector<16x1xf32>
    %30 = vector.broadcast %29 : vector<16x1xf32> to vector<16x128xf32>
    %31 = arith.subf %27, %30 : vector<16x128xf32>
    %32 = math.exp %31 : vector<16x128xf32>
    %cst_30 = arith.constant dense<0.000000e+00> : vector<16x128xf32>
    %33 = tpu.matmul %32, %23, %cst_30 {dimension_numbers = #tpu.dot_dimension_numbers<[1], [0], [0], [1], [0, 0, 1, 1], [], []>} : vector<16x128xf32>, vector<128x128xf32>, vector<16x128xf32> -> vector<16x128xf32>
    %34 = tpu.reciprocal %33 : vector<16x128xf32> -> vector<16x128xf32>
    %35 = arith.mulf %32, %34 : vector<16x128xf32>
    %c0_31 = arith.constant 0 : index
    %c0_32 = arith.constant 0 : index
    %c0_33 = arith.constant 0 : index
    %36 = vector.load %arg16[%c0_31, %c0_32, %c0_33] : memref<1x16x128xf32, #tpu.memory_space<vmem>>, vector<1x16x128xf32>
    %37 = vector.shape_cast %36 : vector<1x16x128xf32> to vector<16x128xf32>
    %38 = vector.shape_cast %35 : vector<16x128xf32> to vector<1x16x128xf32>
    tpu.vector_store %arg16[%c0_31, %c0_32, %c0_33], %38 {strides = array<i32>} : memref<1x16x128xf32, #tpu.memory_space<vmem>>, vector<1x16x128xf32>,
    %39 = tpu.concatenate %20, %20, %20, %20, %20, %20, %20, %20 in 0 : vector<16x128xf32>, vector<16x128xf32>, vector<16x128xf32>, vector<16x128xf32>, vector<16x128xf32>, vector<16x128xf32>, vector<16x128xf32>, vector<16x128xf32> -> vector<128x128xf32>
    %40 = arith.mulf %39, %22 : vector<128x128xf32>
    %cst_34 = arith.constant dense<0.000000e+00> : vector<16x128xf32>
    %41 = tpu.matmul %35, %40, %cst_34 {dimension_numbers = #tpu.dot_dimension_numbers<[1], [0], [0], [1], [0, 0, 1, 1], [], []>} : vector<16x128xf32>, vector<128x128xf32>, vector<16x128xf32> -> vector<16x128xf32>
    %c0_35 = arith.constant 0 : index
    %c0_36 = arith.constant 0 : index
    %42 = vector.load %arg10[%c0_35, %c0_36] : memref<128x128xf32, #tpu.memory_space<vmem>>, vector<128x128xf32>
    %cst_37 = arith.constant dense<0.000000e+00> : vector<16x128xf32>
    %43 = tpu.matmul %41, %42, %cst_37 {dimension_numbers = #tpu.dot_dimension_numbers<[1], [0], [0], [1], [0, 0, 1, 1], [], []>} : vector<16x128xf32>, vector<128x128xf32>, vector<16x128xf32> -> vector<16x128xf32>
    %c0_38 = arith.constant 0 : index
    %c0_39 = arith.constant 0 : index
    %44 = vector.load %arg11[%c0_38, %c0_39] : memref<1x128xf32, #tpu.memory_space<vmem>>, vector<1x128xf32>
    %45 = vector.broadcast %44 : vector<1x128xf32> to vector<16x128xf32>
    %46 = arith.addf %43, %45 : vector<16x128xf32>
    %47 = vector.shape_cast %46 : vector<16x128xf32> to vector<1x16x128xf32>
    %c0_40 = arith.constant 0 : index
    %c0_41 = arith.constant 0 : index
    %c0_42 = arith.constant 0 : index
    %48 = vector.load %arg15[%c0_40, %c0_41, %c0_42] : memref<1x16x128xf32, #tpu.memory_space<vmem>>, vector<1x16x128xf32>
    tpu.vector_store %arg15[%c0_40, %c0_41, %c0_42], %47 {strides = array<i32>} : memref<1x16x128xf32, #tpu.memory_space<vmem>>, vector<1x16x128xf32>,
    return
  }
  func.func @transform_0(%arg0: i32) -> (i32, i32, i32) {
    %c0_i32 = arith.constant 0 : i32
    %c0_i32_0 = arith.constant 0 : i32
    %c0_i32_1 = arith.constant 0 : i32
    return %arg0, %c0_i32, %c0_i32_0 : i32, i32, i32
  }
  func.func @transform_1(%arg0: i32) -> (i32, i32, i32) {
    %c0_i32 = arith.constant 0 : i32
    %c0_i32_0 = arith.constant 0 : i32
    %c0_i32_1 = arith.constant 0 : i32
    return %arg0, %c0_i32, %c0_i32_0 : i32, i32, i32
  }
  func.func @transform_2(%arg0: i32) -> (i32, i32, i32) {
    %c0_i32 = arith.constant 0 : i32
    %c0_i32_0 = arith.constant 0 : i32
    %c0_i32_1 = arith.constant 0 : i32
    return %arg0, %c0_i32, %c0_i32_0 : i32, i32, i32
  }
  func.func @transform_3(%arg0: i32) -> (i32, i32) {
    %c0_i32 = arith.constant 0 : i32
    %c0_i32_0 = arith.constant 0 : i32
    %c0_i32_1 = arith.constant 0 : i32
    return %c0_i32, %c0_i32_0 : i32, i32
  }
  func.func @transform_4(%arg0: i32) -> (i32, i32) {
    %c0_i32 = arith.constant 0 : i32
    %c0_i32_0 = arith.constant 0 : i32
    %c0_i32_1 = arith.constant 0 : i32
    return %c0_i32, %c0_i32_0 : i32, i32
  }
  func.func @transform_5(%arg0: i32) -> (i32, i32) {
    %c0_i32 = arith.constant 0 : i32
    %c0_i32_0 = arith.constant 0 : i32
    %c0_i32_1 = arith.constant 0 : i32
    return %c0_i32, %c0_i32_0 : i32, i32
  }
  func.func @transform_6(%arg0: i32) -> (i32, i32) {
    %c0_i32 = arith.constant 0 : i32
    %c0_i32_0 = arith.constant 0 : i32
    %c0_i32_1 = arith.constant 0 : i32
    return %c0_i32, %c0_i32_0 : i32, i32
  }
  func.func @transform_7(%arg0: i32) -> (i32, i32) {
    %c0_i32 = arith.constant 0 : i32
    %c0_i32_0 = arith.constant 0 : i32
    %c0_i32_1 = arith.constant 0 : i32
    return %c0_i32, %c0_i32_0 : i32, i32
  }
  func.func @transform_8(%arg0: i32) -> (i32, i32) {
    %c0_i32 = arith.constant 0 : i32
    %c0_i32_0 = arith.constant 0 : i32
    %c0_i32_1 = arith.constant 0 : i32
    return %c0_i32, %c0_i32_0 : i32, i32
  }
  func.func @transform_9(%arg0: i32) -> (i32, i32) {
    %c0_i32 = arith.constant 0 : i32
    %c0_i32_0 = arith.constant 0 : i32
    %c0_i32_1 = arith.constant 0 : i32
    return %c0_i32, %c0_i32_0 : i32, i32
  }
  func.func @transform_10(%arg0: i32) -> (i32, i32) {
    %c0_i32 = arith.constant 0 : i32
    %c0_i32_0 = arith.constant 0 : i32
    %c0_i32_1 = arith.constant 0 : i32
    return %c0_i32, %c0_i32_0 : i32, i32
  }
  func.func @transform_11(%arg0: i32) -> (i32, i32) {
    %c0_i32 = arith.constant 0 : i32
    %c0_i32_0 = arith.constant 0 : i32
    %c0_i32_1 = arith.constant 0 : i32
    return %c0_i32, %c0_i32_0 : i32, i32
  }
  func.func @transform_12(%arg0: i32) -> (i32, i32) {
    %c0_i32 = arith.constant 0 : i32
    %c0_i32_0 = arith.constant 0 : i32
    %c0_i32_1 = arith.constant 0 : i32
    return %c0_i32, %c0_i32_0 : i32, i32
  }
  func.func @transform_13(%arg0: i32) -> (i32, i32) {
    %c0_i32 = arith.constant 0 : i32
    %c0_i32_0 = arith.constant 0 : i32
    %c0_i32_1 = arith.constant 0 : i32
    return %c0_i32, %c0_i32_0 : i32, i32
  }
  func.func @transform_14(%arg0: i32) -> (i32, i32, i32) {
    %c0_i32 = arith.constant 0 : i32
    %c0_i32_0 = arith.constant 0 : i32
    %c0_i32_1 = arith.constant 0 : i32
    return %arg0, %c0_i32, %c0_i32_0 : i32, i32, i32
  }
  func.func @transform_15(%arg0: i32) -> (i32, i32, i32) {
    %c0_i32 = arith.constant 0 : i32
    %c0_i32_0 = arith.constant 0 : i32
    %c0_i32_1 = arith.constant 0 : i32
    return %arg0, %c0_i32, %c0_i32_0 : i32, i32, i32
  }
}

</mosaic_0001>

<llo_original>
// kernel: tpu_custom_call.1
$region0: #{tpu_custom_call.1}
  #allocation0 [shape = 'u32[]', space=smem, size = 0x4, offset = 0x4, fixed_abs, tag = 'smem constant byte address 0x4 - core index']
  #allocation1 [shape = 'u32[144,128]{1,0:T(1,128)}', space=vmem, size = 0x12000, scoped, tag = 'internal scratch']
  %s0 = inlined_call_operand.hbm [shape: f32[2,16,128], index: 0, kind: input, shape index: {}]
  %s1 = inlined_call_operand.hbm [shape: f32[2,16,128], index: 1, kind: input, shape index: {}]
  %s2 = inlined_call_operand.hbm [shape: f32[2,16,128], index: 2, kind: input, shape index: {}]
  %s3 = inlined_call_operand.hbm [shape: f32[128,128], index: 3, kind: input, shape index: {}]
  %s4 = inlined_call_operand.vmem [shape: f32[1,128], index: 4, kind: input, shape index: {}]
  %s5 = inlined_call_operand.hbm [shape: f32[128,128], index: 5, kind: input, shape index: {}]
  %s6 = inlined_call_operand.vmem [shape: f32[1,128], index: 6, kind: input, shape index: {}]
  %s7 = inlined_call_operand.hbm [shape: f32[128,128], index: 7, kind: input, shape index: {}]
  %s8 = inlined_call_operand.vmem [shape: f32[1,128], index: 8, kind: input, shape index: {}]
  %s9 = inlined_call_operand.hbm [shape: f32[128,128], index: 9, kind: input, shape index: {}]
  %s10 = inlined_call_operand.vmem [shape: f32[1,128], index: 10, kind: input, shape index: {}]
  %s11 = inlined_call_operand.hbm [shape: f32[128,128], index: 11, kind: input, shape index: {}]
  %s12 = inlined_call_operand.hbm [shape: f32[128,128], index: 12, kind: input, shape index: {}]
  %s13 = inlined_call_operand.hbm [shape: f32[128,128], index: 13, kind: input, shape index: {}]
  %s14 = inlined_call_operand.hbm [shape: f32[2,16,128], index: 14, kind: output, shape index: {0}]
  %s15 = inlined_call_operand.hbm [shape: f32[2,16,128], index: 15, kind: output, shape index: {1}]
  %16 = xla_tuple %s14, %s15
  %s17 = sld [smem:[#allocation0]]
  $region137: #{tpu_custom_call.1} parent=0
    _
  %s19 = ssub.s32 1, %s17
  %s20 = scalar_select 0, %s19, %s17
  $region1: #{tpu_custom_call.1} parent=0
    #allocation2 [shape = 'u8[16384]{0}', space=vmem, size = 0x4000, scoped, tag = 'input window, operand 0']
    #allocation3 [shape = 's32[2]{0}', space=sflag, size = 0x8, scoped, tag = 'scoped memory for tpu_custom_call.1']
    #allocation4 [shape = 's32[2]{0}', space=sflag, size = 0x8, scoped, tag = 'scoped memory for tpu_custom_call.1']
    #allocation5 [shape = 'u8[16384]{0}', space=vmem, size = 0x4000, scoped, tag = 'input window, operand 1']
    #allocation6 [shape = 's32[2]{0}', space=sflag, size = 0x8, scoped, tag = 'scoped memory for tpu_custom_call.1']
    #allocation7 [shape = 'u8[16384]{0}', space=vmem, size = 0x4000, scoped, tag = 'input window, operand 2']
    #allocation8 [shape = 'u8[65536]{0}', space=vmem, size = 0x10000, scoped, tag = 'input window, operand 3, single buffered']
    #allocation9 [shape = 's32[1]{0}', space=sflag, size = 0x4, scoped, tag = 'scoped memory for tpu_custom_call.1']
    #allocation10 [shape = 'u8[65536]{0}', space=vmem, size = 0x10000, scoped, tag = 'input window, operand 5, single buffered']
    #allocation11 [shape = 'u8[65536]{0}', space=vmem, size = 0x10000, scoped, tag = 'input window, operand 7, single buffered']
    #allocation12 [shape = 's32[1]{0}', space=sflag, size = 0x4, scoped, tag = 'scoped memory for tpu_custom_call.1']
    #allocation13 [shape = 'u8[65536]{0}', space=vmem, size = 0x10000, scoped, tag = 'input window, operand 9, single buffered']
    #allocation14 [shape = 'u8[65536]{0}', space=vmem, size = 0x10000, scoped, tag = 'input window, operand 11, single buffered']
    #allocation15 [shape = 's32[1]{0}', space=sflag, size = 0x4, scoped, tag = 'scoped memory for tpu_custom_call.1']
    #allocation16 [shape = 'u8[65536]{0}', space=vmem, size = 0x10000, scoped, tag = 'input window, operand 12, single buffered']
    #allocation17 [shape = 'u8[65536]{0}', space=vmem, size = 0x10000, scoped, tag = 'input window, operand 13, single buffered']
    #allocation18 [shape = 's32[1]{0}', space=sflag, size = 0x4, scoped, tag = 'scoped memory for tpu_custom_call.1']
    #allocation19 [shape = 'u8[16384]{0}', space=vmem, size = 0x4000, scoped, tag = 'output window, operand 0']
    #allocation20 [shape = 'u8[16384]{0}', space=vmem, size = 0x4000, scoped, tag = 'output window, operand 1']
    #allocation21 [shape = 's32[2]{0}', space=sflag, size = 0x8, scoped, tag = 'scoped memory for tpu_custom_call.1']
    %21 = vsyncpa [#allocation3], 0
    %s22 = scalar_lea.sflag [#allocation3], 1
    %23 = vsyncpa %s22, 0
    %24 = vsyncpa [#allocation6], 0
    %s25 = scalar_lea.sflag [#allocation6], 1
    %26 = vsyncpa %s25, 0
    %27 = vsyncpa [#allocation9], 0
    %28 = vsyncpa [#allocation12], 0
    %29 = vsyncpa [#allocation15], 0
    %30 = vsyncpa [#allocation18], 0
    %31 = vsyncpa [#allocation4], 0
    %s32 = scalar_lea.sflag [#allocation4], 1
    %33 = vsyncpa %s32, 0
    %34 = vsyncpa [#allocation21], 0
    %s35 = scalar_lea.sflag [#allocation21], 1
    %36 = vsyncpa %s35, 0
    loop: start=0, step=1, limit=4
    $region2: #{tpu_custom_call.1} parent=1 // loop_pre_header
      _
    $region3: #{tpu_custom_call.1} parent=1 // loop_header
      %s38 = sphi 0, %s42
      %p39 = scmp.ge.s32.totalorder %s38, 4
      %s48 = sphi 0, %s50
      %s51 = sphi 0, %s48
      %s52 = sphi 0, %s51
      %s68 = sphi 0, %s52
      %s74 = sphi 0, %s76
      %s77 = sphi 0, %s74
      %s78 = sphi 0, %s77
      %s94 = sphi 0, %s78
      %s100 = sphi 0, %s102
      %s103 = sphi 0, %s100
      %s104 = sphi 0, %s103
      %s120 = sphi 0, %s104
      %s124 = sphi 0, %s124
      %s126 = sphi 0, %s124
      %s127 = sphi 0, %s126
      %s141 = sphi 0, %s127
      %s145 = sphi 0, %s145
      %s147 = sphi 0, %s145
      %s148 = sphi 0, %s147
      %s162 = sphi 0, %s148
      %s166 = sphi 0, %s166
      %s168 = sphi 0, %s166
      %s169 = sphi 0, %s168
      %s183 = sphi 0, %s169
      %s187 = sphi 0, %s187
      %s189 = sphi 0, %s187
      %s190 = sphi 0, %s189
      %s204 = sphi 0, %s190
      %s208 = sphi 0, %s208
      %s210 = sphi 0, %s208
      %s211 = sphi 0, %s210
      %s225 = sphi 0, %s211
      %s229 = sphi 0, %s229
      %s231 = sphi 0, %s229
      %s232 = sphi 0, %s231
      %s246 = sphi 0, %s232
      %s250 = sphi 0, %s250
      %s252 = sphi 0, %s250
      %s253 = sphi 0, %s252
      %s267 = sphi 0, %s253
      %s271 = sphi 0, %s271
      %s273 = sphi 0, %s271
      %s274 = sphi 0, %s273
      %s288 = sphi 0, %s274
      %s292 = sphi 0, %s292
      %s294 = sphi 0, %s292
      %s295 = sphi 0, %s294
      %s309 = sphi 0, %s295
      %s313 = sphi 0, %s313
      %s315 = sphi 0, %s313
      %s316 = sphi 0, %s315
      %s330 = sphi 0, %s316
      %s334 = sphi 0, %s334
      %s336 = sphi 0, %s334
      %s337 = sphi 0, %s336
      %s351 = sphi 0, %s337
      %s357 = sphi 0, %s359
      %s360 = sphi 0, %s357
      %s361 = sphi 0, %s360
      %s377 = sphi 0, %s361
      %s383 = sphi 0, %s385
      %s386 = sphi 0, %s383
      %s387 = sphi 0, %s386
      %s403 = sphi 0, %s387
    $region4: #{tpu_custom_call.1} parent=1 // loop_header_branch
      %41 = sbr.rel (%p39) target = $region8
    $region5: #{tpu_custom_call.1} parent=1 // loop_body
      %s43 = ssub.s32 %s38, 1
      %s44 = ssub.s32 %s38, 2
      %s45 = sadd.s32 %s38, 1
      %s46 = ssub.s32 %s38, %s45
      %p47 = scmp.eq.s32.totalorder %s46, 0
      %s49 = sadd.s32 %s48, 1
      %s50 = scalar_select %p47, %s48, %s49
      %p53 = pneg %p47
      %p54 = scmp.eq.s32.totalorder %s38, 1
      %p55 = por %p53, %p54
      %p56 = scmp.ne.s32.totalorder %s48, %s51
      %p57 = scmp.eq.s32.totalorder %s38, 0
      %p58 = por %p56, %p57
      %p59 = scmp.ne.s32.totalorder %s48, %s51
      %p60 = scmp.eq.s32.totalorder %s43, 1
      %p61 = por %p59, %p60
      %p62 = scmp.ne.s32.totalorder %s51, %s52
      %p63 = scmp.eq.s32.totalorder %s43, 0
      %p64 = por %p62, %p63
      %p65 = scmp.ne.s32.totalorder %s51, %s52
      %p66 = scmp.eq.s32.totalorder %s44, 1
      %p67 = por %p65, %p66
      %p69 = scmp.ne.s32.totalorder %s52, %s68
      %p70 = scmp.eq.s32.totalorder %s44, 0
      %p71 = por %p69, %p70
      %s72 = ssub.s32 %s38, %s45
      %p73 = scmp.eq.s32.totalorder %s72, 0
      %s75 = sadd.s32 %s74, 1
      %s76 = scalar_select %p73, %s74, %s75
      %p79 = pneg %p73
      %p80 = scmp.eq.s32.totalorder %s38, 1
      %p81 = por %p79, %p80
      %p82 = scmp.ne.s32.totalorder %s74, %s77
      %p83 = scmp.eq.s32.totalorder %s38, 0
      %p84 = por %p82, %p83
      %p85 = scmp.ne.s32.totalorder %s74, %s77
      %p86 = scmp.eq.s32.totalorder %s43, 1
      %p87 = por %p85, %p86
      %p88 = scmp.ne.s32.totalorder %s77, %s78
      %p89 = scmp.eq.s32.totalorder %s43, 0
      %p90 = por %p88, %p89
      %p91 = scmp.ne.s32.totalorder %s77, %s78
      %p92 = scmp.eq.s32.totalorder %s44, 1
      %p93 = por %p91, %p92
      %p95 = scmp.ne.s32.totalorder %s78, %s94
      %p96 = scmp.eq.s32.totalorder %s44, 0
      %p97 = por %p95, %p96
      %s98 = ssub.s32 %s38, %s45
      %p99 = scmp.eq.s32.totalorder %s98, 0
      %s101 = sadd.s32 %s100, 1
      %s102 = scalar_select %p99, %s100, %s101
      %p105 = pneg %p99
      %p106 = scmp.eq.s32.totalorder %s38, 1
      %p107 = por %p105, %p106
      %p108 = scmp.ne.s32.totalorder %s100, %s103
      %p109 = scmp.eq.s32.totalorder %s38, 0
      %p110 = por %p108, %p109
      %p111 = scmp.ne.s32.totalorder %s100, %s103
      %p112 = scmp.eq.s32.totalorder %s43, 1
      %p113 = por %p111, %p112
      %p114 = scmp.ne.s32.totalorder %s103, %s104
      %p115 = scmp.eq.s32.totalorder %s43, 0
      %p116 = por %p114, %p115
      %p117 = scmp.ne.s32.totalorder %s103, %s104
      %p118 = scmp.eq.s32.totalorder %s44, 1
      %p119 = por %p117, %p118
      %p121 = scmp.ne.s32.totalorder %s104, %s120
      %p122 = scmp.eq.s32.totalorder %s44, 0
      %p123 = por %p121, %p122
      %s125 = sadd.s32 %s124, 1
      %p128 = scmp.eq.s32.totalorder %s38, 1
      %p129 = scmp.ne.s32.totalorder %s124, %s126
      %p130 = scmp.eq.s32.totalorder %s38, 0
      %p131 = por %p129, %p130
      %p132 = scmp.ne.s32.totalorder %s124, %s126
      %p133 = scmp.eq.s32.totalorder %s43, 1
      %p134 = por %p132, %p133
      %p135 = scmp.ne.s32.totalorder %s126, %s127
      %p136 = scmp.eq.s32.totalorder %s43, 0
      %p137 = por %p135, %p136
      %p138 = scmp.ne.s32.totalorder %s126, %s127
      %p139 = scmp.eq.s32.totalorder %s44, 1
      %p140 = por %p138, %p139
      %p142 = scmp.ne.s32.totalorder %s127, %s141
      %p143 = scmp.eq.s32.totalorder %s44, 0
      %p144 = por %p142, %p143
      %s146 = sadd.s32 %s145, 1
      %p149 = scmp.eq.s32.totalorder %s38, 1
      %p150 = scmp.ne.s32.totalorder %s145, %s147
      %p151 = scmp.eq.s32.totalorder %s38, 0
      %p152 = por %p150, %p151
      %p153 = scmp.ne.s32.totalorder %s145, %s147
      %p154 = scmp.eq.s32.totalorder %s43, 1
      %p155 = por %p153, %p154
      %p156 = scmp.ne.s32.totalorder %s147, %s148
      %p157 = scmp.eq.s32.totalorder %s43, 0
      %p158 = por %p156, %p157
      %p159 = scmp.ne.s32.totalorder %s147, %s148
      %p160 = scmp.eq.s32.totalorder %s44, 1
      %p161 = por %p159, %p160
      %p163 = scmp.ne.s32.totalorder %s148, %s162
      %p164 = scmp.eq.s32.totalorder %s44, 0
      %p165 = por %p163, %p164
      %s167 = sadd.s32 %s166, 1
      %p170 = scmp.eq.s32.totalorder %s38, 1
      %p171 = scmp.ne.s32.totalorder %s166, %s168
      %p172 = scmp.eq.s32.totalorder %s38, 0
      %p173 = por %p171, %p172
      %p174 = scmp.ne.s32.totalorder %s166, %s168
      %p175 = scmp.eq.s32.totalorder %s43, 1
      %p176 = por %p174, %p175
      %p177 = scmp.ne.s32.totalorder %s168, %s169
      %p178 = scmp.eq.s32.totalorder %s43, 0
      %p179 = por %p177, %p178
      %p180 = scmp.ne.s32.totalorder %s168, %s169
      %p181 = scmp.eq.s32.totalorder %s44, 1
      %p182 = por %p180, %p181
      %p184 = scmp.ne.s32.totalorder %s169, %s183
      %p185 = scmp.eq.s32.totalorder %s44, 0
      %p186 = por %p184, %p185
      %s188 = sadd.s32 %s187, 1
      %p191 = scmp.eq.s32.totalorder %s38, 1
      %p192 = scmp.ne.s32.totalorder %s187, %s189
      %p193 = scmp.eq.s32.totalorder %s38, 0
      %p194 = por %p192, %p193
      %p195 = scmp.ne.s32.totalorder %s187, %s189
      %p196 = scmp.eq.s32.totalorder %s43, 1
      %p197 = por %p195, %p196
      %p198 = scmp.ne.s32.totalorder %s189, %s190
      %p199 = scmp.eq.s32.totalorder %s43, 0
      %p200 = por %p198, %p199
      %p201 = scmp.ne.s32.totalorder %s189, %s190
      %p202 = scmp.eq.s32.totalorder %s44, 1
      %p203 = por %p201, %p202
      %p205 = scmp.ne.s32.totalorder %s190, %s204
      %p206 = scmp.eq.s32.totalorder %s44, 0
      %p207 = por %p205, %p206
      %s209 = sadd.s32 %s208, 1
      %p212 = scmp.eq.s32.totalorder %s38, 1
      %p213 = scmp.ne.s32.totalorder %s208, %s210
      %p214 = scmp.eq.s32.totalorder %s38, 0
      %p215 = por %p213, %p214
      %p216 = scmp.ne.s32.totalorder %s208, %s210
      %p217 = scmp.eq.s32.totalorder %s43, 1
      %p218 = por %p216, %p217
      %p219 = scmp.ne.s32.totalorder %s210, %s211
      %p220 = scmp.eq.s32.totalorder %s43, 0
      %p221 = por %p219, %p220
      %p222 = scmp.ne.s32.totalorder %s210, %s211
      %p223 = scmp.eq.s32.totalorder %s44, 1
      %p224 = por %p222, %p223
      %p226 = scmp.ne.s32.totalorder %s211, %s225
      %p227 = scmp.eq.s32.totalorder %s44, 0
      %p228 = por %p226, %p227
      %s230 = sadd.s32 %s229, 1
      %p233 = scmp.eq.s32.totalorder %s38, 1
      %p234 = scmp.ne.s32.totalorder %s229, %s231
      %p235 = scmp.eq.s32.totalorder %s38, 0
      %p236 = por %p234, %p235
      %p237 = scmp.ne.s32.totalorder %s229, %s231
      %p238 = scmp.eq.s32.totalorder %s43, 1
      %p239 = por %p237, %p238
      %p240 = scmp.ne.s32.totalorder %s231, %s232
      %p241 = scmp.eq.s32.totalorder %s43, 0
      %p242 = por %p240, %p241
      %p243 = scmp.ne.s32.totalorder %s231, %s232
      %p244 = scmp.eq.s32.totalorder %s44, 1
      %p245 = por %p243, %p244
      %p247 = scmp.ne.s32.totalorder %s232, %s246
      %p248 = scmp.eq.s32.totalorder %s44, 0
      %p249 = por %p247, %p248
      %s251 = sadd.s32 %s250, 1
      %p254 = scmp.eq.s32.totalorder %s38, 1
      %p255 = scmp.ne.s32.totalorder %s250, %s252
      %p256 = scmp.eq.s32.totalorder %s38, 0
      %p257 = por %p255, %p256
      %p258 = scmp.ne.s32.totalorder %s250, %s252
      %p259 = scmp.eq.s32.totalorder %s43, 1
      %p260 = por %p258, %p259
      %p261 = scmp.ne.s32.totalorder %s252, %s253
      %p262 = scmp.eq.s32.totalorder %s43, 0
      %p263 = por %p261, %p262
      %p264 = scmp.ne.s32.totalorder %s252, %s253
      %p265 = scmp.eq.s32.totalorder %s44, 1
      %p266 = por %p264, %p265
      %p268 = scmp.ne.s32.totalorder %s253, %s267
      %p269 = scmp.eq.s32.totalorder %s44, 0
      %p270 = por %p268, %p269
      %s272 = sadd.s32 %s271, 1
      %p275 = scmp.eq.s32.totalorder %s38, 1
      %p276 = scmp.ne.s32.totalorder %s271, %s273
      %p277 = scmp.eq.s32.totalorder %s38, 0
      %p278 = por %p276, %p277
      %p279 = scmp.ne.s32.totalorder %s271, %s273
      %p280 = scmp.eq.s32.totalorder %s43, 1
      %p281 = por %p279, %p280
      %p282 = scmp.ne.s32.totalorder %s273, %s274
      %p283 = scmp.eq.s32.totalorder %s43, 0
      %p284 = por %p282, %p283
      %p285 = scmp.ne.s32.totalorder %s273, %s274
      %p286 = scmp.eq.s32.totalorder %s44, 1
      %p287 = por %p285, %p286
      %p289 = scmp.ne.s32.totalorder %s274, %s288
      %p290 = scmp.eq.s32.totalorder %s44, 0
      %p291 = por %p289, %p290
      %s293 = sadd.s32 %s292, 1
      %p296 = scmp.eq.s32.totalorder %s38, 1
      %p297 = scmp.ne.s32.totalorder %s292, %s294
      %p298 = scmp.eq.s32.totalorder %s38, 0
      %p299 = por %p297, %p298
      %p300 = scmp.ne.s32.totalorder %s292, %s294
      %p301 = scmp.eq.s32.totalorder %s43, 1
      %p302 = por %p300, %p301
      %p303 = scmp.ne.s32.totalorder %s294, %s295
      %p304 = scmp.eq.s32.totalorder %s43, 0
      %p305 = por %p303, %p304
      %p306 = scmp.ne.s32.totalorder %s294, %s295
      %p307 = scmp.eq.s32.totalorder %s44, 1
      %p308 = por %p306, %p307
      %p310 = scmp.ne.s32.totalorder %s295, %s309
      %p311 = scmp.eq.s32.totalorder %s44, 0
      %p312 = por %p310, %p311
      %s314 = sadd.s32 %s313, 1
      %p317 = scmp.eq.s32.totalorder %s38, 1
      %p318 = scmp.ne.s32.totalorder %s313, %s315
      %p319 = scmp.eq.s32.totalorder %s38, 0
      %p320 = por %p318, %p319
      %p321 = scmp.ne.s32.totalorder %s313, %s315
      %p322 = scmp.eq.s32.totalorder %s43, 1
      %p323 = por %p321, %p322
      %p324 = scmp.ne.s32.totalorder %s315, %s316
      %p325 = scmp.eq.s32.totalorder %s43, 0
      %p326 = por %p324, %p325
      %p327 = scmp.ne.s32.totalorder %s315, %s316
      %p328 = scmp.eq.s32.totalorder %s44, 1
      %p329 = por %p327, %p328
      %p331 = scmp.ne.s32.totalorder %s316, %s330
      %p332 = scmp.eq.s32.totalorder %s44, 0
      %p333 = por %p331, %p332
      %s335 = sadd.s32 %s334, 1
      %p338 = scmp.eq.s32.totalorder %s38, 1
      %p339 = scmp.ne.s32.totalorder %s334, %s336
      %p340 = scmp.eq.s32.totalorder %s38, 0
      %p341 = por %p339, %p340
      %p342 = scmp.ne.s32.totalorder %s334, %s336
      %p343 = scmp.eq.s32.totalorder %s43, 1
      %p344 = por %p342, %p343
      %p345 = scmp.ne.s32.totalorder %s336, %s337
      %p346 = scmp.eq.s32.totalorder %s43, 0
      %p347 = por %p345, %p346
      %p348 = scmp.ne.s32.totalorder %s336, %s337
      %p349 = scmp.eq.s32.totalorder %s44, 1
      %p350 = por %p348, %p349
      %p352 = scmp.ne.s32.totalorder %s337, %s351
      %p353 = scmp.eq.s32.totalorder %s44, 0
      %p354 = por %p352, %p353
      %s355 = ssub.s32 %s38, %s45
      %p356 = scmp.eq.s32.totalorder %s355, 0
      %s358 = sadd.s32 %s357, 1
      %s359 = scalar_select %p356, %s357, %s358
      %p362 = pneg %p356
      %p363 = scmp.eq.s32.totalorder %s38, 1
      %p364 = por %p362, %p363
      %p365 = scmp.ne.s32.totalorder %s357, %s360
      %p366 = scmp.eq.s32.totalorder %s38, 0
      %p367 = por %p365, %p366
      %p368 = scmp.ne.s32.totalorder %s357, %s360
      %p369 = scmp.eq.s32.totalorder %s43, 1
      %p370 = por %p368, %p369
      %p371 = scmp.ne.s32.totalorder %s360, %s361
      %p372 = scmp.eq.s32.totalorder %s43, 0
      %p373 = por %p371, %p372
      %p374 = scmp.ne.s32.totalorder %s360, %s361
      %p375 = scmp.eq.s32.totalorder %s44, 1
      %p376 = por %p374, %p375
      %p378 = scmp.ne.s32.totalorder %s361, %s377
      %p379 = scmp.eq.s32.totalorder %s44, 0
      %p380 = por %p378, %p379
      %s381 = ssub.s32 %s38, %s45
      %p382 = scmp.eq.s32.totalorder %s381, 0
      %s384 = sadd.s32 %s383, 1
      %s385 = scalar_select %p382, %s383, %s384
      %p388 = pneg %p382
      %p389 = scmp.eq.s32.totalorder %s38, 1
      %p390 = por %p388, %p389
      %p391 = scmp.ne.s32.totalorder %s383, %s386
      %p392 = scmp.eq.s32.totalorder %s38, 0
      %p393 = por %p391, %p392
      %p394 = scmp.ne.s32.totalorder %s383, %s386
      %p395 = scmp.eq.s32.totalorder %s43, 1
      %p396 = por %p394, %p395
      %p397 = scmp.ne.s32.totalorder %s386, %s387
      %p398 = scmp.eq.s32.totalorder %s43, 0
      %p399 = por %p397, %p398
      %p400 = scmp.ne.s32.totalorder %s386, %s387
      %p401 = scmp.eq.s32.totalorder %s44, 1
      %p402 = por %p400, %p401
      %p404 = scmp.ne.s32.totalorder %s387, %s403
      %p405 = scmp.eq.s32.totalorder %s44, 0
      %p406 = por %p404, %p405
      %p407 = scmp.le.s32.totalorder 1, %s38
      %p408 = scmp.lt.s32.totalorder %s38, 3
      %p409 = pnand %p407, %p408
      %p410 = pneg %p409
      // Predicated region
      $region9: #{tpu_custom_call.1} parent=5 // pred_check
        _
      $region10: #{tpu_custom_call.1} parent=5 // pred_check_branch
        %412 = sbr.rel (%p409) target = $region12
      $region11: #{tpu_custom_call.1} parent=5 // pred_region
        %s413 = ssub.s32 %s38, 1
        // Predicated region
        $region13: #{tpu_custom_call.1} parent=11 // pred_check
          %p414 = pneg %p137
        $region14: #{tpu_custom_call.1} parent=11 // pred_check_branch
          %416 = sbr.rel (%p414) target = $region16
        $region15: #{tpu_custom_call.1} parent=11 // pred_region
          %s418 = ssub.s32 2048, 2048
          %419 = vsyncadd [#allocation9], %s418
          %s420 = sshll.u32 [#allocation8], 4
          %s421 = int_to_ptr.vmem [resolvable:$true] %s420
          %426 = dma.hbm_to_vmem [thread:$0]  %s3, 2048, %s421, [#allocation9], 128, 128, 8
        $region16: #{tpu_custom_call.1} parent=11 // pred_fallthru
          _
        // Predicated region
        $region17: #{tpu_custom_call.1} parent=11 // pred_check
          %p427 = pneg %p158
        $region18: #{tpu_custom_call.1} parent=11 // pred_check_branch
          %429 = sbr.rel (%p427) target = $region20
        $region19: #{tpu_custom_call.1} parent=11 // pred_region
          _
        $region20: #{tpu_custom_call.1} parent=11 // pred_fallthru
          _
        // Predicated region
        $region21: #{tpu_custom_call.1} parent=11 // pred_check
          %p430 = pneg %p179
        $region22: #{tpu_custom_call.1} parent=11 // pred_check_branch
          %432 = sbr.rel (%p430) target = $region24
        $region23: #{tpu_custom_call.1} parent=11 // pred_region
          %s434 = ssub.s32 2048, 2048
          %435 = vsyncadd [#allocation9], %s434
          %s436 = sshll.u32 [#allocation10], 4
          %s437 = int_to_ptr.vmem [resolvable:$true] %s436
          %442 = dma.hbm_to_vmem [thread:$0]  %s5, 2048, %s437, [#allocation9], 128, 128, 8
        $region24: #{tpu_custom_call.1} parent=11 // pred_fallthru
          _
        // Predicated region
        $region25: #{tpu_custom_call.1} parent=11 // pred_check
          %p443 = pneg %p200
        $region26: #{tpu_custom_call.1} parent=11 // pred_check_branch
          %445 = sbr.rel (%p443) target = $region28
        $region27: #{tpu_custom_call.1} parent=11 // pred_region
          _
        $region28: #{tpu_custom_call.1} parent=11 // pred_fallthru
          _
        // Predicated region
        $region29: #{tpu_custom_call.1} parent=11 // pred_check
          %p446 = pneg %p221
        $region30: #{tpu_custom_call.1} parent=11 // pred_check_branch
          %448 = sbr.rel (%p446) target = $region32
        $region31: #{tpu_custom_call.1} parent=11 // pred_region
          %s450 = ssub.s32 2048, 2048
          %451 = vsyncadd [#allocation12], %s450
          %s452 = sshll.u32 [#allocation11], 4
          %s453 = int_to_ptr.vmem [resolvable:$true] %s452
          %458 = dma.hbm_to_vmem [thread:$0]  %s7, 2048, %s453, [#allocation12], 128, 128, 8
        $region32: #{tpu_custom_call.1} parent=11 // pred_fallthru
          _
        // Predicated region
        $region33: #{tpu_custom_call.1} parent=11 // pred_check
          %p459 = pneg %p242
        $region34: #{tpu_custom_call.1} parent=11 // pred_check_branch
          %461 = sbr.rel (%p459) target = $region36
        $region35: #{tpu_custom_call.1} parent=11 // pred_region
          _
        $region36: #{tpu_custom_call.1} parent=11 // pred_fallthru
          _
        // Predicated region
        $region37: #{tpu_custom_call.1} parent=11 // pred_check
          %p462 = pneg %p263
        $region38: #{tpu_custom_call.1} parent=11 // pred_check_branch
          %464 = sbr.rel (%p462) target = $region40
        $region39: #{tpu_custom_call.1} parent=11 // pred_region
          %s466 = ssub.s32 2048, 2048
          %467 = vsyncadd [#allocation12], %s466
          %s468 = sshll.u32 [#allocation13], 4
          %s469 = int_to_ptr.vmem [resolvable:$true] %s468
          %474 = dma.hbm_to_vmem [thread:$0]  %s9, 2048, %s469, [#allocation12], 128, 128, 8
        $region40: #{tpu_custom_call.1} parent=11 // pred_fallthru
          _
        // Predicated region
        $region41: #{tpu_custom_call.1} parent=11 // pred_check
          %p475 = pneg %p284
        $region42: #{tpu_custom_call.1} parent=11 // pred_check_branch
          %477 = sbr.rel (%p475) target = $region44
        $region43: #{tpu_custom_call.1} parent=11 // pred_region
          _
        $region44: #{tpu_custom_call.1} parent=11 // pred_fallthru
          _
        // Predicated region
        $region45: #{tpu_custom_call.1} parent=11 // pred_check
          %p478 = pneg %p305
        $region46: #{tpu_custom_call.1} parent=11 // pred_check_branch
          %480 = sbr.rel (%p478) target = $region48
        $region47: #{tpu_custom_call.1} parent=11 // pred_region
          %s482 = ssub.s32 2048, 2048
          %483 = vsyncadd [#allocation15], %s482
          %s484 = sshll.u32 [#allocation14], 4
          %s485 = int_to_ptr.vmem [resolvable:$true] %s484
          %490 = dma.hbm_to_vmem [thread:$0]  %s11, 2048, %s485, [#allocation15], 128, 128, 8
        $region48: #{tpu_custom_call.1} parent=11 // pred_fallthru
          _
        // Predicated region
        $region49: #{tpu_custom_call.1} parent=11 // pred_check
          %p491 = pneg %p326
        $region50: #{tpu_custom_call.1} parent=11 // pred_check_branch
          %493 = sbr.rel (%p491) target = $region52
        $region51: #{tpu_custom_call.1} parent=11 // pred_region
          %s495 = ssub.s32 2048, 2048
          %496 = vsyncadd [#allocation15], %s495
          %s497 = sshll.u32 [#allocation16], 4
          %s498 = int_to_ptr.vmem [resolvable:$true] %s497
          %503 = dma.hbm_to_vmem [thread:$0]  %s12, 2048, %s498, [#allocation15], 128, 128, 8
        $region52: #{tpu_custom_call.1} parent=11 // pred_fallthru
          _
        // Predicated region
        $region53: #{tpu_custom_call.1} parent=11 // pred_check
          %p504 = pneg %p347
        $region54: #{tpu_custom_call.1} parent=11 // pred_check_branch
          %506 = sbr.rel (%p504) target = $region56
        $region55: #{tpu_custom_call.1} parent=11 // pred_region
          %s508 = ssub.s32 2048, 2048
          %509 = vsyncadd [#allocation18], %s508
          %s510 = sshll.u32 [#allocation17], 4
          %s511 = int_to_ptr.vmem [resolvable:$true] %s510
          %516 = dma.hbm_to_vmem [thread:$0]  %s13, 2048, %s511, [#allocation18], 128, 128, 8
        $region56: #{tpu_custom_call.1} parent=11 // pred_fallthru
          _
      $region12: #{tpu_custom_call.1} parent=5 // pred_fallthru
        _
      %p517 = scmp.lt.s32.totalorder %s38, 2
      // Predicated region
      $region57: #{tpu_custom_call.1} parent=5 // pred_check
        %p518 = pneg %p517
      $region58: #{tpu_custom_call.1} parent=5 // pred_check_branch
        %520 = sbr.rel (%p518) target = $region60
      $region59: #{tpu_custom_call.1} parent=5 // pred_region
        // Predicated region
        $region61: #{tpu_custom_call.1} parent=59 // pred_check
          %p521 = pneg %p58
        $region62: #{tpu_custom_call.1} parent=59 // pred_check_branch
          %523 = sbr.rel (%p521) target = $region64
        $region63: #{tpu_custom_call.1} parent=59 // pred_region
          %s524 = sand.u32 %s48, 1
          %s525 = scalar_lea.sflag [#allocation3], %s524
          %s526 = sand.u32 %s48, 1
          %s527 = smul.addr %s526, 16
          %s528 = scalar_lea.vmem [#allocation2], %s527
          %s530 = ssub.s32 256, 256
          %531 = vsyncadd %s525, %s530
          %s532 = smul.addr %s38, 2
          %s533 = smul.addr %s532, 128
          %s534 = scalar_lea.hbm %s0, %s533
          %s535 = sshll.u32 %s528, 4
          %s536 = int_to_ptr.vmem [resolvable:$true] %s535
          %541 = dma.hbm_to_vmem [thread:$0]  %s534, 256, %s536, %s525, 128, 128, 8
        $region64: #{tpu_custom_call.1} parent=59 // pred_fallthru
          _
        // Predicated region
        $region65: #{tpu_custom_call.1} parent=59 // pred_check
          %p542 = pneg %p84
        $region66: #{tpu_custom_call.1} parent=59 // pred_check_branch
          %544 = sbr.rel (%p542) target = $region68
        $region67: #{tpu_custom_call.1} parent=59 // pred_region
          %s545 = sand.u32 %s38, 1
          %s546 = scalar_lea.sflag [#allocation6], %s545
          %s547 = sand.u32 %s74, 1
          %s548 = smul.addr %s547, 16
          %s549 = scalar_lea.vmem [#allocation5], %s548
          %s551 = ssub.s32 256, 256
          %552 = vsyncadd %s546, %s551
          %s553 = smul.addr %s38, 2
          %s554 = smul.addr %s553, 128
          %s555 = scalar_lea.hbm %s1, %s554
          %s556 = sshll.u32 %s549, 4
          %s557 = int_to_ptr.vmem [resolvable:$true] %s556
          %562 = dma.hbm_to_vmem [thread:$0]  %s555, 256, %s557, %s546, 128, 128, 8
        $region68: #{tpu_custom_call.1} parent=59 // pred_fallthru
          _
        // Predicated region
        $region69: #{tpu_custom_call.1} parent=59 // pred_check
          %p563 = pneg %p110
        $region70: #{tpu_custom_call.1} parent=59 // pred_check_branch
          %565 = sbr.rel (%p563) target = $region72
        $region71: #{tpu_custom_call.1} parent=59 // pred_region
          %s566 = sand.u32 %s38, 1
          %s567 = scalar_lea.sflag [#allocation6], %s566
          %s568 = sand.u32 %s100, 1
          %s569 = smul.addr %s568, 16
          %s570 = scalar_lea.vmem [#allocation7], %s569
          %s572 = ssub.s32 256, 256
          %573 = vsyncadd %s567, %s572
          %s574 = smul.addr %s38, 2
          %s575 = smul.addr %s574, 128
          %s576 = scalar_lea.hbm %s2, %s575
          %s577 = sshll.u32 %s570, 4
          %s578 = int_to_ptr.vmem [resolvable:$true] %s577
          %583 = dma.hbm_to_vmem [thread:$0]  %s576, 256, %s578, %s567, 128, 128, 8
        $region72: #{tpu_custom_call.1} parent=59 // pred_fallthru
          _
      $region60: #{tpu_custom_call.1} parent=5 // pred_fallthru
        _
      %p584 = scmp.le.s32.totalorder 1, %s38
      %p585 = scmp.lt.s32.totalorder %s38, 3
      %p586 = pnand %p584, %p585
      %p587 = pneg %p586
      // Predicated region
      $region73: #{tpu_custom_call.1} parent=5 // pred_check
        _
      $region74: #{tpu_custom_call.1} parent=5 // pred_check_branch
        %589 = sbr.rel (%p586) target = $region76
      $region75: #{tpu_custom_call.1} parent=5 // pred_region
        %s590 = ssub.s32 %s38, 1
        %s591 = sand.u32 %s51, 1
        %s592 = scalar_lea.sflag [#allocation3], %s591
        %s593 = sand.u32 %s51, 1
        %s594 = smul.addr %s593, 16
        %s595 = scalar_lea.vmem [#allocation2], %s594
        // Predicated region
        $region77: #{tpu_custom_call.1} parent=75 // pred_check
          %p596 = pneg %p64
        $region78: #{tpu_custom_call.1} parent=75 // pred_check_branch
          %598 = sbr.rel (%p596) target = $region80
        $region79: #{tpu_custom_call.1} parent=75 // pred_region
          %599 = dma.done %s592, 256
        $region80: #{tpu_custom_call.1} parent=75 // pred_fallthru
          _
        %s600 = sand.u32 %s43, 1
        %s601 = scalar_lea.sflag [#allocation6], %s600
        %s602 = sand.u32 %s77, 1
        %s603 = smul.addr %s602, 16
        %s604 = scalar_lea.vmem [#allocation5], %s603
        // Predicated region
        $region81: #{tpu_custom_call.1} parent=75 // pred_check
          %p605 = pneg %p90
        $region82: #{tpu_custom_call.1} parent=75 // pred_check_branch
          %607 = sbr.rel (%p605) target = $region84
        $region83: #{tpu_custom_call.1} parent=75 // pred_region
          %608 = dma.done %s601, 256
        $region84: #{tpu_custom_call.1} parent=75 // pred_fallthru
          _
        %s609 = sand.u32 %s43, 1
        %s610 = scalar_lea.sflag [#allocation6], %s609
        %s611 = sand.u32 %s103, 1
        %s612 = smul.addr %s611, 16
        %s613 = scalar_lea.vmem [#allocation7], %s612
        // Predicated region
        $region85: #{tpu_custom_call.1} parent=75 // pred_check
          %p614 = pneg %p116
        $region86: #{tpu_custom_call.1} parent=75 // pred_check_branch
          %616 = sbr.rel (%p614) target = $region88
        $region87: #{tpu_custom_call.1} parent=75 // pred_region
          %617 = dma.done %s610, 256
        $region88: #{tpu_custom_call.1} parent=75 // pred_fallthru
          _
        // Predicated region
        $region89: #{tpu_custom_call.1} parent=75 // pred_check
          %p618 = pneg %p137
        $region90: #{tpu_custom_call.1} parent=75 // pred_check_branch
          %620 = sbr.rel (%p618) target = $region92
        $region91: #{tpu_custom_call.1} parent=75 // pred_region
          %621 = dma.done [#allocation9], 2048
        $region92: #{tpu_custom_call.1} parent=75 // pred_fallthru
          _
        // Predicated region
        $region93: #{tpu_custom_call.1} parent=75 // pred_check
          %p622 = pneg %p179
        $region94: #{tpu_custom_call.1} parent=75 // pred_check_branch
          %624 = sbr.rel (%p622) target = $region96
        $region95: #{tpu_custom_call.1} parent=75 // pred_region
          %625 = dma.done [#allocation9], 2048
        $region96: #{tpu_custom_call.1} parent=75 // pred_fallthru
          _
        // Predicated region
        $region97: #{tpu_custom_call.1} parent=75 // pred_check
          %p626 = pneg %p221
        $region98: #{tpu_custom_call.1} parent=75 // pred_check_branch
          %628 = sbr.rel (%p626) target = $region100
        $region99: #{tpu_custom_call.1} parent=75 // pred_region
          %629 = dma.done [#allocation12], 2048
        $region100: #{tpu_custom_call.1} parent=75 // pred_fallthru
          _
        // Predicated region
        $region101: #{tpu_custom_call.1} parent=75 // pred_check
          %p630 = pneg %p263
        $region102: #{tpu_custom_call.1} parent=75 // pred_check_branch
          %632 = sbr.rel (%p630) target = $region104
        $region103: #{tpu_custom_call.1} parent=75 // pred_region
          %633 = dma.done [#allocation12], 2048
        $region104: #{tpu_custom_call.1} parent=75 // pred_fallthru
          _
        // Predicated region
        $region105: #{tpu_custom_call.1} parent=75 // pred_check
          %p634 = pneg %p305
        $region106: #{tpu_custom_call.1} parent=75 // pred_check_branch
          %636 = sbr.rel (%p634) target = $region108
        $region107: #{tpu_custom_call.1} parent=75 // pred_region
          %637 = dma.done [#allocation15], 2048
        $region108: #{tpu_custom_call.1} parent=75 // pred_fallthru
          _
        // Predicated region
        $region109: #{tpu_custom_call.1} parent=75 // pred_check
          %p638 = pneg %p326
        $region110: #{tpu_custom_call.1} parent=75 // pred_check_branch
          %640 = sbr.rel (%p638) target = $region112
        $region111: #{tpu_custom_call.1} parent=75 // pred_region
          %641 = dma.done [#allocation15], 2048
        $region112: #{tpu_custom_call.1} parent=75 // pred_fallthru
          _
        // Predicated region
        $region113: #{tpu_custom_call.1} parent=75 // pred_check
          %p642 = pneg %p347
        $region114: #{tpu_custom_call.1} parent=75 // pred_check_branch
          %644 = sbr.rel (%p642) target = $region116
        $region115: #{tpu_custom_call.1} parent=75 // pred_region
          %645 = dma.done [#allocation18], 2048
        $region116: #{tpu_custom_call.1} parent=75 // pred_fallthru
          _
        %s646 = sand.u32 %s51, 1
        %s647 = scalar_lea.sflag [#allocation3], %s646
        %s648 = sand.u32 %s51, 1
        %s649 = smul.addr %s648, 16
        %s650 = scalar_lea.vmem [#allocation2], %s649
        %p651 = pneg %p64
        %p652 = pneg %p61
        %s653 = sand.u32 %s43, 1
        %s654 = scalar_lea.sflag [#allocation6], %s653
        %s655 = sand.u32 %s77, 1
        %s656 = smul.addr %s655, 16
        %s657 = scalar_lea.vmem [#allocation5], %s656
        %p658 = pneg %p90
        %p659 = pneg %p87
        %s660 = sand.u32 %s43, 1
        %s661 = scalar_lea.sflag [#allocation6], %s660
        %s662 = sand.u32 %s103, 1
        %s663 = smul.addr %s662, 16
        %s664 = scalar_lea.vmem [#allocation7], %s663
        %p665 = pneg %p116
        %p666 = pneg %p113
        %p667 = pneg %p137
        %p668 = pneg %p134
        %p669 = pneg %p158
        %p670 = pneg %p155
        %p671 = pneg %p179
        %p672 = pneg %p176
        %p673 = pneg %p200
        %p674 = pneg %p197
        %p675 = pneg %p221
        %p676 = pneg %p218
        %p677 = pneg %p242
        %p678 = pneg %p239
        %p679 = pneg %p263
        %p680 = pneg %p260
        %p681 = pneg %p284
        %p682 = pneg %p281
        %p683 = pneg %p305
        %p684 = pneg %p302
        %p685 = pneg %p326
        %p686 = pneg %p323
        %p687 = pneg %p347
        %p688 = pneg %p344
        %p689 = pneg %p373
        %p690 = pneg %p370
        %s691 = sand.u32 %s360, 1
        %s692 = scalar_lea.sflag [#allocation4], %s691
        %s693 = sand.u32 %s360, 1
        %s694 = smul.addr %s693, 16
        %s695 = scalar_lea.vmem [#allocation19], %s694
        %p696 = pneg %p399
        %p697 = pneg %p396
        %s698 = sand.u32 %s386, 1
        %s699 = scalar_lea.sflag [#allocation21], %s698
        %s700 = sand.u32 %s386, 1
        %s701 = smul.addr %s700, 16
        %s702 = scalar_lea.vmem [#allocation20], %s701
        %v703 = vld [vmem:[%s595] sm:$0xff]
        %v704 = vld [vmem:[%s595 + $0x8] sm:$0xff]
        %v705 = vld [vmem:[%s604] sm:$0xff]
        %v706 = vld [vmem:[%s604 + $0x8] sm:$0xff]
        %v707 = vld [vmem:[%s613] sm:$0xff]
        %v708 = vld [vmem:[%s613 + $0x8] sm:$0xff]
        %v709 = vld [vmem:[#allocation8] sm:$0xff]
        %v710 = vld [vmem:[#allocation8 + $0x8] sm:$0xff]
        %v711 = vld [vmem:[#allocation8 + $0x10] sm:$0xff]
        %v712 = vld [vmem:[#allocation8 + $0x18] sm:$0xff]
        %v713 = vld [vmem:[#allocation8 + $0x20] sm:$0xff]
        %v714 = vld [vmem:[#allocation8 + $0x28] sm:$0xff]
        %v715 = vld [vmem:[#allocation8 + $0x30] sm:$0xff]
        %v716 = vld [vmem:[#allocation8 + $0x38] sm:$0xff]
        %v717 = vld [vmem:[#allocation8 + $0x40] sm:$0xff]
        %v718 = vld [vmem:[#allocation8 + $0x48] sm:$0xff]
        %v719 = vld [vmem:[#allocation8 + $0x50] sm:$0xff]
        %v720 = vld [vmem:[#allocation8 + $0x58] sm:$0xff]
        %v721 = vld [vmem:[#allocation8 + $0x60] sm:$0xff]
        %v722 = vld [vmem:[#allocation8 + $0x68] sm:$0xff]
        %v723 = vld [vmem:[#allocation8 + $0x70] sm:$0xff]
        %v724 = vld [vmem:[#allocation8 + $0x78] sm:$0xff]
        %v725 = vld [vmem:[%s4] sm:$0x1]
        %v727 = vlaneseq
        %v728 = vshrl.u32 %v727, 7
        %v729 = vsub.s32 0, %v728
        %v730 = vrot.slane %v725, %v729
        %732 = vmatprep.subr.mxu0 0.0
        %733 = vmatpush1.msra.mxu0 %v724
        %734 = vmatprep.subr.mxu0 0.0
        %735 = vmatpush1.msra.mxu0 %v723
        %736 = vmatprep.subr.mxu0 0.0
        %737 = vmatpush1.msra.mxu0 %v722
        %738 = vmatprep.subr.mxu0 0.0
        %739 = vmatpush1.msra.mxu0 %v721
        %740 = vmatprep.subr.mxu0 0.0
        %741 = vmatpush1.msra.mxu0 %v720
        %742 = vmatprep.subr.mxu0 0.0
        %743 = vmatpush1.msra.mxu0 %v719
        %744 = vmatprep.subr.mxu0 0.0
        %745 = vmatpush1.msra.mxu0 %v718
        %746 = vmatprep.subr.mxu0 0.0
        %747 = vmatpush1.msra.mxu0 %v717
        %748 = vmatprep.subr.mxu0 0.0
        %749 = vmatpush1.msra.mxu0 %v716
        %750 = vmatprep.subr.mxu0 0.0
        %751 = vmatpush1.msra.mxu0 %v715
        %752 = vmatprep.subr.mxu0 0.0
        %753 = vmatpush1.msra.mxu0 %v714
        %754 = vmatprep.subr.mxu0 0.0
        %755 = vmatpush1.msra.mxu0 %v713
        %756 = vmatprep.subr.mxu0 0.0
        %757 = vmatpush1.msra.mxu0 %v712
        %758 = vmatprep.subr.mxu0 0.0
        %759 = vmatpush1.msra.mxu0 %v711
        %760 = vmatprep.subr.mxu0 0.0
        %761 = vmatpush1.msra.mxu0 %v710
        %762 = vmatprep.subr.mxu0 0.0
        %763 = vmatpush1.msra.mxu0 %v709
        %764 = vmatprep.subr.mxu0 0.0
        %765 = vmatpush2.msra.mxu0 0.0
        %766 = vmatprep.subr.mxu0 0.0
        %767 = vmatpush2.msra.mxu0 0.0
        %768 = vmatprep.subr.mxu0 0.0
        %769 = vmatpush2.msra.mxu0 0.0
        %770 = vmatprep.subr.mxu0 0.0
        %771 = vmatpush2.msra.mxu0 0.0
        %772 = vmatprep.subr.mxu0 0.0
        %773 = vmatpush2.msra.mxu0 0.0
        %774 = vmatprep.subr.mxu0 0.0
        %775 = vmatpush2.msra.mxu0 0.0
        %776 = vmatprep.subr.mxu0 0.0
        %777 = vmatpush2.msra.mxu0 0.0
        %778 = vmatprep.subr.mxu0 0.0
        %779 = vmatpush2.msra.mxu0 0.0
        %780 = vmatprep.subr.mxu0 0.0
        %781 = vmatpush2.msra.mxu0 0.0
        %782 = vmatprep.subr.mxu0 0.0
        %783 = vmatpush2.msra.mxu0 0.0
        %784 = vmatprep.subr.mxu0 0.0
        %785 = vmatpush2.msra.mxu0 0.0
        %786 = vmatprep.subr.mxu0 0.0
        %787 = vmatpush2.msra.mxu0 0.0
        %788 = vmatprep.subr.mxu0 0.0
        %789 = vmatpush2.msra.mxu0 0.0
        %790 = vmatprep.subr.mxu0 0.0
        %791 = vmatpush2.msra.mxu0 0.0
        %792 = vmatprep.subr.mxu0 0.0
        %793 = vmatpush2.msra.mxu0 0.0
        %794 = vmatprep.subr.mxu0 0.0
        %795 = vmatpush2.msra.mxu0 0.0
        %796 = vmatprep.mubr.f32.mxu0 0.0
        %797 = vmatmul.mubr.f32.gmra.mxu0 %v703
        %v798 = vpop.f32.mrf.mxu0
        %v799 = vadd.f32 %v730, %v798
        %v800 = vpop.f32.mrf.mxu0
        %801 = vmatprep.mubr.f32.mxu0 0.0
        %802 = vmatmul.mubr.f32.gmra.mxu0 %v704
        %v803 = vpop.f32.mrf.mxu0
        %v804 = vadd.f32 %v730, %v803
        %v805 = vpop.f32.mrf.mxu0
        %806 = vdwg.mxu0
        %v807 = vld [vmem:[#allocation10] sm:$0xff]
        %v808 = vld [vmem:[#allocation10 + $0x8] sm:$0xff]
        %v809 = vld [vmem:[#allocation10 + $0x10] sm:$0xff]
        %v810 = vld [vmem:[#allocation10 + $0x18] sm:$0xff]
        %v811 = vld [vmem:[#allocation10 + $0x20] sm:$0xff]
        %v812 = vld [vmem:[#allocation10 + $0x28] sm:$0xff]
        %v813 = vld [vmem:[#allocation10 + $0x30] sm:$0xff]
        %v814 = vld [vmem:[#allocation10 + $0x38] sm:$0xff]
        %v815 = vld [vmem:[#allocation10 + $0x40] sm:$0xff]
        %v816 = vld [vmem:[#allocation10 + $0x48] sm:$0xff]
        %v817 = vld [vmem:[#allocation10 + $0x50] sm:$0xff]
        %v818 = vld [vmem:[#allocation10 + $0x58] sm:$0xff]
        %v819 = vld [vmem:[#allocation10 + $0x60] sm:$0xff]
        %v820 = vld [vmem:[#allocation10 + $0x68] sm:$0xff]
        %v821 = vld [vmem:[#allocation10 + $0x70] sm:$0xff]
        %v822 = vld [vmem:[#allocation10 + $0x78] sm:$0xff]
        %v823 = vld [vmem:[%s6] sm:$0x1]
        %v825 = vlaneseq
        %v826 = vshrl.u32 %v825, 7
        %v827 = vsub.s32 0, %v826
        %v828 = vrot.slane %v823, %v827
        %830 = vmatprep.subr.mxu0 0.0
        %831 = vmatpush1.msra.mxu0 %v822
        %832 = vmatprep.subr.mxu0 0.0
        %833 = vmatpush1.msra.mxu0 %v821
        %834 = vmatprep.subr.mxu0 0.0
        %835 = vmatpush1.msra.mxu0 %v820
        %836 = vmatprep.subr.mxu0 0.0
        %837 = vmatpush1.msra.mxu0 %v819
        %838 = vmatprep.subr.mxu0 0.0
        %839 = vmatpush1.msra.mxu0 %v818
        %840 = vmatprep.subr.mxu0 0.0
        %841 = vmatpush1.msra.mxu0 %v817
        %842 = vmatprep.subr.mxu0 0.0
        %843 = vmatpush1.msra.mxu0 %v816
        %844 = vmatprep.subr.mxu0 0.0
        %845 = vmatpush1.msra.mxu0 %v815
        %846 = vmatprep.subr.mxu0 0.0
        %847 = vmatpush1.msra.mxu0 %v814
        %848 = vmatprep.subr.mxu0 0.0
        %849 = vmatpush1.msra.mxu0 %v813
        %850 = vmatprep.subr.mxu0 0.0
        %851 = vmatpush1.msra.mxu0 %v812
        %852 = vmatprep.subr.mxu0 0.0
        %853 = vmatpush1.msra.mxu0 %v811
        %854 = vmatprep.subr.mxu0 0.0
        %855 = vmatpush1.msra.mxu0 %v810
        %856 = vmatprep.subr.mxu0 0.0
        %857 = vmatpush1.msra.mxu0 %v809
        %858 = vmatprep.subr.mxu0 0.0
        %859 = vmatpush1.msra.mxu0 %v808
        %860 = vmatprep.subr.mxu0 0.0
        %861 = vmatpush1.msra.mxu0 %v807
        %862 = vmatprep.subr.mxu0 0.0
        %863 = vmatpush2.msra.mxu0 0.0
        %864 = vmatprep.subr.mxu0 0.0
        %865 = vmatpush2.msra.mxu0 0.0
        %866 = vmatprep.subr.mxu0 0.0
        %867 = vmatpush2.msra.mxu0 0.0
        %868 = vmatprep.subr.mxu0 0.0
        %869 = vmatpush2.msra.mxu0 0.0
        %870 = vmatprep.subr.mxu0 0.0
        %871 = vmatpush2.msra.mxu0 0.0
        %872 = vmatprep.subr.mxu0 0.0
        %873 = vmatpush2.msra.mxu0 0.0
        %874 = vmatprep.subr.mxu0 0.0
        %875 = vmatpush2.msra.mxu0 0.0
        %876 = vmatprep.subr.mxu0 0.0
        %877 = vmatpush2.msra.mxu0 0.0
        %878 = vmatprep.subr.mxu0 0.0
        %879 = vmatpush2.msra.mxu0 0.0
        %880 = vmatprep.subr.mxu0 0.0
        %881 = vmatpush2.msra.mxu0 0.0
        %882 = vmatprep.subr.mxu0 0.0
        %883 = vmatpush2.msra.mxu0 0.0
        %884 = vmatprep.subr.mxu0 0.0
        %885 = vmatpush2.msra.mxu0 0.0
        %886 = vmatprep.subr.mxu0 0.0
        %887 = vmatpush2.msra.mxu0 0.0
        %888 = vmatprep.subr.mxu0 0.0
        %889 = vmatpush2.msra.mxu0 0.0
        %890 = vmatprep.subr.mxu0 0.0
        %891 = vmatpush2.msra.mxu0 0.0
        %892 = vmatprep.subr.mxu0 0.0
        %893 = vmatpush2.msra.mxu0 0.0
        %894 = vmatprep.mubr.f32.mxu0 0.0
        %895 = vmatmul.mubr.f32.gmra.mxu0 %v705
        %v896 = vpop.f32.mrf.mxu0
        %v897 = vadd.f32 %v828, %v896
        %v898 = vpop.f32.mrf.mxu0
        %899 = vmatprep.mubr.f32.mxu0 0.0
        %900 = vmatmul.mubr.f32.gmra.mxu0 %v706
        %v901 = vpop.f32.mrf.mxu0
        %v902 = vadd.f32 %v828, %v901
        %v903 = vpop.f32.mrf.mxu0
        %904 = vdwg.mxu0
        %v905 = vld [vmem:[#allocation11] sm:$0xff]
        %v906 = vld [vmem:[#allocation11 + $0x8] sm:$0xff]
        %v907 = vld [vmem:[#allocation11 + $0x10] sm:$0xff]
        %v908 = vld [vmem:[#allocation11 + $0x18] sm:$0xff]
        %v909 = vld [vmem:[#allocation11 + $0x20] sm:$0xff]
        %v910 = vld [vmem:[#allocation11 + $0x28] sm:$0xff]
        %v911 = vld [vmem:[#allocation11 + $0x30] sm:$0xff]
        %v912 = vld [vmem:[#allocation11 + $0x38] sm:$0xff]
        %v913 = vld [vmem:[#allocation11 + $0x40] sm:$0xff]
        %v914 = vld [vmem:[#allocation11 + $0x48] sm:$0xff]
        %v915 = vld [vmem:[#allocation11 + $0x50] sm:$0xff]
        %v916 = vld [vmem:[#allocation11 + $0x58] sm:$0xff]
        %v917 = vld [vmem:[#allocation11 + $0x60] sm:$0xff]
        %v918 = vld [vmem:[#allocation11 + $0x68] sm:$0xff]
        %v919 = vld [vmem:[#allocation11 + $0x70] sm:$0xff]
        %v920 = vld [vmem:[#allocation11 + $0x78] sm:$0xff]
        %v921 = vld [vmem:[%s8] sm:$0x1]
        %v923 = vlaneseq
        %v924 = vshrl.u32 %v923, 7
        %v925 = vsub.s32 0, %v924
        %v926 = vrot.slane %v921, %v925
        %928 = vmatprep.subr.mxu0 0.0
        %929 = vmatpush1.msra.mxu0 %v920
        %930 = vmatprep.subr.mxu0 0.0
        %931 = vmatpush1.msra.mxu0 %v919
        %932 = vmatprep.subr.mxu0 0.0
        %933 = vmatpush1.msra.mxu0 %v918
        %934 = vmatprep.subr.mxu0 0.0
        %935 = vmatpush1.msra.mxu0 %v917
        %936 = vmatprep.subr.mxu0 0.0
        %937 = vmatpush1.msra.mxu0 %v916
        %938 = vmatprep.subr.mxu0 0.0
        %939 = vmatpush1.msra.mxu0 %v915
        %940 = vmatprep.subr.mxu0 0.0
        %941 = vmatpush1.msra.mxu0 %v914
        %942 = vmatprep.subr.mxu0 0.0
        %943 = vmatpush1.msra.mxu0 %v913
        %944 = vmatprep.subr.mxu0 0.0
        %945 = vmatpush1.msra.mxu0 %v912
        %946 = vmatprep.subr.mxu0 0.0
        %947 = vmatpush1.msra.mxu0 %v911
        %948 = vmatprep.subr.mxu0 0.0
        %949 = vmatpush1.msra.mxu0 %v910
        %950 = vmatprep.subr.mxu0 0.0
        %951 = vmatpush1.msra.mxu0 %v909
        %952 = vmatprep.subr.mxu0 0.0
        %953 = vmatpush1.msra.mxu0 %v908
        %954 = vmatprep.subr.mxu0 0.0
        %955 = vmatpush1.msra.mxu0 %v907
        %956 = vmatprep.subr.mxu0 0.0
        %957 = vmatpush1.msra.mxu0 %v906
        %958 = vmatprep.subr.mxu0 0.0
        %959 = vmatpush1.msra.mxu0 %v905
        %960 = vmatprep.subr.mxu0 0.0
        %961 = vmatpush2.msra.mxu0 0.0
        %962 = vmatprep.subr.mxu0 0.0
        %963 = vmatpush2.msra.mxu0 0.0
        %964 = vmatprep.subr.mxu0 0.0
        %965 = vmatpush2.msra.mxu0 0.0
        %966 = vmatprep.subr.mxu0 0.0
        %967 = vmatpush2.msra.mxu0 0.0
        %968 = vmatprep.subr.mxu0 0.0
        %969 = vmatpush2.msra.mxu0 0.0
        %970 = vmatprep.subr.mxu0 0.0
        %971 = vmatpush2.msra.mxu0 0.0
        %972 = vmatprep.subr.mxu0 0.0
        %973 = vmatpush2.msra.mxu0 0.0
        %974 = vmatprep.subr.mxu0 0.0
        %975 = vmatpush2.msra.mxu0 0.0
        %976 = vmatprep.subr.mxu0 0.0
        %977 = vmatpush2.msra.mxu0 0.0
        %978 = vmatprep.subr.mxu0 0.0
        %979 = vmatpush2.msra.mxu0 0.0
        %980 = vmatprep.subr.mxu0 0.0
        %981 = vmatpush2.msra.mxu0 0.0
        %982 = vmatprep.subr.mxu0 0.0
        %983 = vmatpush2.msra.mxu0 0.0
        %984 = vmatprep.subr.mxu0 0.0
        %985 = vmatpush2.msra.mxu0 0.0
        %986 = vmatprep.subr.mxu0 0.0
        %987 = vmatpush2.msra.mxu0 0.0
        %988 = vmatprep.subr.mxu0 0.0
        %989 = vmatpush2.msra.mxu0 0.0
        %990 = vmatprep.subr.mxu0 0.0
        %991 = vmatpush2.msra.mxu0 0.0
        %992 = vmatprep.mubr.f32.mxu0 0.0
        %993 = vmatmul.mubr.f32.gmra.mxu0 %v707
        %v994 = vpop.f32.mrf.mxu0
        %v995 = vadd.f32 %v926, %v994
        %v996 = vpop.f32.mrf.mxu0
        %997 = vmatprep.mubr.f32.mxu0 0.0
        %998 = vmatmul.mubr.f32.gmra.mxu0 %v708
        %v999 = vpop.f32.mrf.mxu0
        %v1000 = vadd.f32 %v926, %v999
        %v1001 = vpop.f32.mrf.mxu0
        %1002 = vdwg.mxu0
        %v1003 = vld [vmem:[#allocation14] sm:$0xff]
        %v1004 = vld [vmem:[#allocation14 + $0x8] sm:$0xff]
        %v1005 = vld [vmem:[#allocation14 + $0x10] sm:$0xff]
        %v1006 = vld [vmem:[#allocation14 + $0x18] sm:$0xff]
        %v1007 = vld [vmem:[#allocation14 + $0x20] sm:$0xff]
        %v1008 = vld [vmem:[#allocation14 + $0x28] sm:$0xff]
        %v1009 = vld [vmem:[#allocation14 + $0x30] sm:$0xff]
        %v1010 = vld [vmem:[#allocation14 + $0x38] sm:$0xff]
        %v1011 = vld [vmem:[#allocation14 + $0x40] sm:$0xff]
        %v1012 = vld [vmem:[#allocation14 + $0x48] sm:$0xff]
        %v1013 = vld [vmem:[#allocation14 + $0x50] sm:$0xff]
        %v1014 = vld [vmem:[#allocation14 + $0x58] sm:$0xff]
        %v1015 = vld [vmem:[#allocation14 + $0x60] sm:$0xff]
        %v1016 = vld [vmem:[#allocation14 + $0x68] sm:$0xff]
        %v1017 = vld [vmem:[#allocation14 + $0x70] sm:$0xff]
        %v1018 = vld [vmem:[#allocation14 + $0x78] sm:$0xff]
        %v1019 = vld [vmem:[#allocation16] sm:$0xff]
        %v1020 = vld [vmem:[#allocation16 + $0x8] sm:$0xff]
        %v1021 = vld [vmem:[#allocation16 + $0x10] sm:$0xff]
        %v1022 = vld [vmem:[#allocation16 + $0x18] sm:$0xff]
        %v1023 = vld [vmem:[#allocation16 + $0x20] sm:$0xff]
        %v1024 = vld [vmem:[#allocation16 + $0x28] sm:$0xff]
        %v1025 = vld [vmem:[#allocation16 + $0x30] sm:$0xff]
        %v1026 = vld [vmem:[#allocation16 + $0x38] sm:$0xff]
        %v1027 = vld [vmem:[#allocation16 + $0x40] sm:$0xff]
        %v1028 = vld [vmem:[#allocation16 + $0x48] sm:$0xff]
        %v1029 = vld [vmem:[#allocation16 + $0x50] sm:$0xff]
        %v1030 = vld [vmem:[#allocation16 + $0x58] sm:$0xff]
        %v1031 = vld [vmem:[#allocation16 + $0x60] sm:$0xff]
        %v1032 = vld [vmem:[#allocation16 + $0x68] sm:$0xff]
        %v1033 = vld [vmem:[#allocation16 + $0x70] sm:$0xff]
        %v1034 = vld [vmem:[#allocation16 + $0x78] sm:$0xff]
        %v1035 = vld [vmem:[#allocation17] sm:$0xff]
        %v1036 = vld [vmem:[#allocation17 + $0x8] sm:$0xff]
        %v1037 = vld [vmem:[#allocation17 + $0x10] sm:$0xff]
        %v1038 = vld [vmem:[#allocation17 + $0x18] sm:$0xff]
        %v1039 = vld [vmem:[#allocation17 + $0x20] sm:$0xff]
        %v1040 = vld [vmem:[#allocation17 + $0x28] sm:$0xff]
        %v1041 = vld [vmem:[#allocation17 + $0x30] sm:$0xff]
        %v1042 = vld [vmem:[#allocation17 + $0x38] sm:$0xff]
        %v1043 = vld [vmem:[#allocation17 + $0x40] sm:$0xff]
        %v1044 = vld [vmem:[#allocation17 + $0x48] sm:$0xff]
        %v1045 = vld [vmem:[#allocation17 + $0x50] sm:$0xff]
        %v1046 = vld [vmem:[#allocation17 + $0x58] sm:$0xff]
        %v1047 = vld [vmem:[#allocation17 + $0x60] sm:$0xff]
        %v1048 = vld [vmem:[#allocation17 + $0x68] sm:$0xff]
        %v1049 = vld [vmem:[#allocation17 + $0x70] sm:$0xff]
        %v1050 = vld [vmem:[#allocation17 + $0x78] sm:$0xff]
        %1051 = vxpose.xlu0.b32.start [1/16] %v897, 128
        %1052 = vxpose.xlu0.b32.cont [2/16] %v902, 128
        %1053 = vxpose.xlu0.b32.cont [3/16] 0.0, 128
        %1054 = vxpose.xlu0.b32.cont [4/16] 0.0, 128
        %1055 = vxpose.xlu0.b32.cont [5/16] 0.0, 128
        %1056 = vxpose.xlu0.b32.cont [6/16] 0.0, 128
        %1057 = vxpose.xlu0.b32.cont [7/16] 0.0, 128
        %1058 = vxpose.xlu0.b32.cont [8/16] 0.0, 128
        %1059 = vxpose.xlu0.b32.cont [9/16] 0.0, 128
        %1060 = vxpose.xlu0.b32.cont [10/16] 0.0, 128
        %1061 = vxpose.xlu0.b32.cont [11/16] 0.0, 128
        %1062 = vxpose.xlu0.b32.cont [12/16] 0.0, 128
        %1063 = vxpose.xlu0.b32.cont [13/16] 0.0, 128
        %1064 = vxpose.xlu0.b32.cont [14/16] 0.0, 128
        %1065 = vxpose.xlu0.b32.cont [15/16] 0.0, 128
        %1066 = vxpose.xlu0.b32.end [16/16] 0.0, 128
        %v1067 = vpop.trf.xlu0
        %v1068 = vpop.trf.xlu0
        %v1069 = vpop.trf.xlu0
        %v1070 = vpop.trf.xlu0
        %v1071 = vpop.trf.xlu0
        %v1072 = vpop.trf.xlu0
        %v1073 = vpop.trf.xlu0
        %v1074 = vpop.trf.xlu0
        %v1075 = vpop.trf.xlu0
        %v1076 = vpop.trf.xlu0
        %v1077 = vpop.trf.xlu0
        %v1078 = vpop.trf.xlu0
        %v1079 = vpop.trf.xlu0
        %v1080 = vpop.trf.xlu0
        %v1081 = vpop.trf.xlu0
        %v1082 = vpop.trf.xlu0
        %1099 = vrot.lane.b32.xlu0 %v1067, 16
        %v1100 = vpop.permute.xlu0 %1099
        %1101 = vrot.lane.b32.xlu0 %v1068, 16
        %v1102 = vpop.permute.xlu0 %1101
        %1103 = vrot.lane.b32.xlu0 %v1069, 16
        %v1104 = vpop.permute.xlu0 %1103
        %1105 = vrot.lane.b32.xlu0 %v1070, 16
        %v1106 = vpop.permute.xlu0 %1105
        %1107 = vrot.lane.b32.xlu0 %v1071, 16
        %v1108 = vpop.permute.xlu0 %1107
        %1109 = vrot.lane.b32.xlu0 %v1072, 16
        %v1110 = vpop.permute.xlu0 %1109
        %1111 = vrot.lane.b32.xlu0 %v1073, 16
        %v1112 = vpop.permute.xlu0 %1111
        %1113 = vrot.lane.b32.xlu0 %v1074, 16
        %v1114 = vpop.permute.xlu0 %1113
        %1115 = vrot.lane.b32.xlu0 %v1075, 16
        %v1116 = vpop.permute.xlu0 %1115
        %1117 = vrot.lane.b32.xlu0 %v1076, 16
        %v1118 = vpop.permute.xlu0 %1117
        %1119 = vrot.lane.b32.xlu0 %v1077, 16
        %v1120 = vpop.permute.xlu0 %1119
        %1121 = vrot.lane.b32.xlu0 %v1078, 16
        %v1122 = vpop.permute.xlu0 %1121
        %1123 = vrot.lane.b32.xlu0 %v1079, 16
        %v1124 = vpop.permute.xlu0 %1123
        %1125 = vrot.lane.b32.xlu0 %v1080, 16
        %v1126 = vpop.permute.xlu0 %1125
        %1127 = vrot.lane.b32.xlu0 %v1081, 16
        %v1128 = vpop.permute.xlu0 %1127
        %1129 = vrot.lane.b32.xlu0 %v1082, 16
        %v1130 = vpop.permute.xlu0 %1129
        %1147 = vrot.lane.b32.xlu0 %v1067, 32
        %v1148 = vpop.permute.xlu0 %1147
        %1149 = vrot.lane.b32.xlu0 %v1068, 32
        %v1150 = vpop.permute.xlu0 %1149
        %1151 = vrot.lane.b32.xlu0 %v1069, 32
        %v1152 = vpop.permute.xlu0 %1151
        %1153 = vrot.lane.b32.xlu0 %v1070, 32
        %v1154 = vpop.permute.xlu0 %1153
        %1155 = vrot.lane.b32.xlu0 %v1071, 32
        %v1156 = vpop.permute.xlu0 %1155
        %1157 = vrot.lane.b32.xlu0 %v1072, 32
        %v1158 = vpop.permute.xlu0 %1157
        %1159 = vrot.lane.b32.xlu0 %v1073, 32
        %v1160 = vpop.permute.xlu0 %1159
        %1161 = vrot.lane.b32.xlu0 %v1074, 32
        %v1162 = vpop.permute.xlu0 %1161
        %1163 = vrot.lane.b32.xlu0 %v1075, 32
        %v1164 = vpop.permute.xlu0 %1163
        %1165 = vrot.lane.b32.xlu0 %v1076, 32
        %v1166 = vpop.permute.xlu0 %1165
        %1167 = vrot.lane.b32.xlu0 %v1077, 32
        %v1168 = vpop.permute.xlu0 %1167
        %1169 = vrot.lane.b32.xlu0 %v1078, 32
        %v1170 = vpop.permute.xlu0 %1169
        %1171 = vrot.lane.b32.xlu0 %v1079, 32
        %v1172 = vpop.permute.xlu0 %1171
        %1173 = vrot.lane.b32.xlu0 %v1080, 32
        %v1174 = vpop.permute.xlu0 %1173
        %1175 = vrot.lane.b32.xlu0 %v1081, 32
        %v1176 = vpop.permute.xlu0 %1175
        %1177 = vrot.lane.b32.xlu0 %v1082, 32
        %v1178 = vpop.permute.xlu0 %1177
        %1195 = vrot.lane.b32.xlu0 %v1067, 48
        %v1196 = vpop.permute.xlu0 %1195
        %1197 = vrot.lane.b32.xlu0 %v1068, 48
        %v1198 = vpop.permute.xlu0 %1197
        %1199 = vrot.lane.b32.xlu0 %v1069, 48
        %v1200 = vpop.permute.xlu0 %1199
        %1201 = vrot.lane.b32.xlu0 %v1070, 48
        %v1202 = vpop.permute.xlu0 %1201
        %1203 = vrot.lane.b32.xlu0 %v1071, 48
        %v1204 = vpop.permute.xlu0 %1203
        %1205 = vrot.lane.b32.xlu0 %v1072, 48
        %v1206 = vpop.permute.xlu0 %1205
        %1207 = vrot.lane.b32.xlu0 %v1073, 48
        %v1208 = vpop.permute.xlu0 %1207
        %1209 = vrot.lane.b32.xlu0 %v1074, 48
        %v1210 = vpop.permute.xlu0 %1209
        %1211 = vrot.lane.b32.xlu0 %v1075, 48
        %v1212 = vpop.permute.xlu0 %1211
        %1213 = vrot.lane.b32.xlu0 %v1076, 48
        %v1214 = vpop.permute.xlu0 %1213
        %1215 = vrot.lane.b32.xlu0 %v1077, 48
        %v1216 = vpop.permute.xlu0 %1215
        %1217 = vrot.lane.b32.xlu0 %v1078, 48
        %v1218 = vpop.permute.xlu0 %1217
        %1219 = vrot.lane.b32.xlu0 %v1079, 48
        %v1220 = vpop.permute.xlu0 %1219
        %1221 = vrot.lane.b32.xlu0 %v1080, 48
        %v1222 = vpop.permute.xlu0 %1221
        %1223 = vrot.lane.b32.xlu0 %v1081, 48
        %v1224 = vpop.permute.xlu0 %1223
        %1225 = vrot.lane.b32.xlu0 %v1082, 48
        %v1226 = vpop.permute.xlu0 %1225
        %1243 = vrot.lane.b32.xlu0 %v1067, 64
        %v1244 = vpop.permute.xlu0 %1243
        %1245 = vrot.lane.b32.xlu0 %v1068, 64
        %v1246 = vpop.permute.xlu0 %1245
        %1247 = vrot.lane.b32.xlu0 %v1069, 64
        %v1248 = vpop.permute.xlu0 %1247
        %1249 = vrot.lane.b32.xlu0 %v1070, 64
        %v1250 = vpop.permute.xlu0 %1249
        %1251 = vrot.lane.b32.xlu0 %v1071, 64
        %v1252 = vpop.permute.xlu0 %1251
        %1253 = vrot.lane.b32.xlu0 %v1072, 64
        %v1254 = vpop.permute.xlu0 %1253
        %1255 = vrot.lane.b32.xlu0 %v1073, 64
        %v1256 = vpop.permute.xlu0 %1255
        %1257 = vrot.lane.b32.xlu0 %v1074, 64
        %v1258 = vpop.permute.xlu0 %1257
        %1259 = vrot.lane.b32.xlu0 %v1075, 64
        %v1260 = vpop.permute.xlu0 %1259
        %1261 = vrot.lane.b32.xlu0 %v1076, 64
        %v1262 = vpop.permute.xlu0 %1261
        %1263 = vrot.lane.b32.xlu0 %v1077, 64
        %v1264 = vpop.permute.xlu0 %1263
        %1265 = vrot.lane.b32.xlu0 %v1078, 64
        %v1266 = vpop.permute.xlu0 %1265
        %1267 = vrot.lane.b32.xlu0 %v1079, 64
        %v1268 = vpop.permute.xlu0 %1267
        %1269 = vrot.lane.b32.xlu0 %v1080, 64
        %v1270 = vpop.permute.xlu0 %1269
        %1271 = vrot.lane.b32.xlu0 %v1081, 64
        %v1272 = vpop.permute.xlu0 %1271
        %1273 = vrot.lane.b32.xlu0 %v1082, 64
        %v1274 = vpop.permute.xlu0 %1273
        %1291 = vrot.lane.b32.xlu0 %v1067, 80
        %v1292 = vpop.permute.xlu0 %1291
        %1293 = vrot.lane.b32.xlu0 %v1068, 80
        %v1294 = vpop.permute.xlu0 %1293
        %1295 = vrot.lane.b32.xlu0 %v1069, 80
        %v1296 = vpop.permute.xlu0 %1295
        %1297 = vrot.lane.b32.xlu0 %v1070, 80
        %v1298 = vpop.permute.xlu0 %1297
        %1299 = vrot.lane.b32.xlu0 %v1071, 80
        %v1300 = vpop.permute.xlu0 %1299
        %1301 = vrot.lane.b32.xlu0 %v1072, 80
        %v1302 = vpop.permute.xlu0 %1301
        %1303 = vrot.lane.b32.xlu0 %v1073, 80
        %v1304 = vpop.permute.xlu0 %1303
        %1305 = vrot.lane.b32.xlu0 %v1074, 80
        %v1306 = vpop.permute.xlu0 %1305
        %1307 = vrot.lane.b32.xlu0 %v1075, 80
        %v1308 = vpop.permute.xlu0 %1307
        %1309 = vrot.lane.b32.xlu0 %v1076, 80
        %v1310 = vpop.permute.xlu0 %1309
        %1311 = vrot.lane.b32.xlu0 %v1077, 80
        %v1312 = vpop.permute.xlu0 %1311
        %1313 = vrot.lane.b32.xlu0 %v1078, 80
        %v1314 = vpop.permute.xlu0 %1313
        %1315 = vrot.lane.b32.xlu0 %v1079, 80
        %v1316 = vpop.permute.xlu0 %1315
        %1317 = vrot.lane.b32.xlu0 %v1080, 80
        %v1318 = vpop.permute.xlu0 %1317
        %1319 = vrot.lane.b32.xlu0 %v1081, 80
        %v1320 = vpop.permute.xlu0 %1319
        %1321 = vrot.lane.b32.xlu0 %v1082, 80
        %v1322 = vpop.permute.xlu0 %1321
        %1339 = vrot.lane.b32.xlu0 %v1067, 96
        %v1340 = vpop.permute.xlu0 %1339
        %1341 = vrot.lane.b32.xlu0 %v1068, 96
        %v1342 = vpop.permute.xlu0 %1341
        %1343 = vrot.lane.b32.xlu0 %v1069, 96
        %v1344 = vpop.permute.xlu0 %1343
        %1345 = vrot.lane.b32.xlu0 %v1070, 96
        %v1346 = vpop.permute.xlu0 %1345
        %1347 = vrot.lane.b32.xlu0 %v1071, 96
        %v1348 = vpop.permute.xlu0 %1347
        %1349 = vrot.lane.b32.xlu0 %v1072, 96
        %v1350 = vpop.permute.xlu0 %1349
        %1351 = vrot.lane.b32.xlu0 %v1073, 96
        %v1352 = vpop.permute.xlu0 %1351
        %1353 = vrot.lane.b32.xlu0 %v1074, 96
        %v1354 = vpop.permute.xlu0 %1353
        %1355 = vrot.lane.b32.xlu0 %v1075, 96
        %v1356 = vpop.permute.xlu0 %1355
        %1357 = vrot.lane.b32.xlu0 %v1076, 96
        %v1358 = vpop.permute.xlu0 %1357
        %1359 = vrot.lane.b32.xlu0 %v1077, 96
        %v1360 = vpop.permute.xlu0 %1359
        %1361 = vrot.lane.b32.xlu0 %v1078, 96
        %v1362 = vpop.permute.xlu0 %1361
        %1363 = vrot.lane.b32.xlu0 %v1079, 96
        %v1364 = vpop.permute.xlu0 %1363
        %1365 = vrot.lane.b32.xlu0 %v1080, 96
        %v1366 = vpop.permute.xlu0 %1365
        %1367 = vrot.lane.b32.xlu0 %v1081, 96
        %v1368 = vpop.permute.xlu0 %1367
        %1369 = vrot.lane.b32.xlu0 %v1082, 96
        %v1370 = vpop.permute.xlu0 %1369
        %1387 = vrot.lane.b32.xlu0 %v1067, 112
        %v1388 = vpop.permute.xlu0 %1387
        %1389 = vrot.lane.b32.xlu0 %v1068, 112
        %v1390 = vpop.permute.xlu0 %1389
        %1391 = vrot.lane.b32.xlu0 %v1069, 112
        %v1392 = vpop.permute.xlu0 %1391
        %1393 = vrot.lane.b32.xlu0 %v1070, 112
        %v1394 = vpop.permute.xlu0 %1393
        %1395 = vrot.lane.b32.xlu0 %v1071, 112
        %v1396 = vpop.permute.xlu0 %1395
        %1397 = vrot.lane.b32.xlu0 %v1072, 112
        %v1398 = vpop.permute.xlu0 %1397
        %1399 = vrot.lane.b32.xlu0 %v1073, 112
        %v1400 = vpop.permute.xlu0 %1399
        %1401 = vrot.lane.b32.xlu0 %v1074, 112
        %v1402 = vpop.permute.xlu0 %1401
        %1403 = vrot.lane.b32.xlu0 %v1075, 112
        %v1404 = vpop.permute.xlu0 %1403
        %1405 = vrot.lane.b32.xlu0 %v1076, 112
        %v1406 = vpop.permute.xlu0 %1405
        %1407 = vrot.lane.b32.xlu0 %v1077, 112
        %v1408 = vpop.permute.xlu0 %1407
        %1409 = vrot.lane.b32.xlu0 %v1078, 112
        %v1410 = vpop.permute.xlu0 %1409
        %1411 = vrot.lane.b32.xlu0 %v1079, 112
        %v1412 = vpop.permute.xlu0 %1411
        %1413 = vrot.lane.b32.xlu0 %v1080, 112
        %v1414 = vpop.permute.xlu0 %1413
        %1415 = vrot.lane.b32.xlu0 %v1081, 112
        %v1416 = vpop.permute.xlu0 %1415
        %1417 = vrot.lane.b32.xlu0 %v1082, 112
        %v1418 = vpop.permute.xlu0 %1417
        %vm1435 = vcmask 130048
        %v1436 = vsel %vm1435, %v1067, %v1100
        %v1437 = vsel %vm1435, %v1068, %v1102
        %v1438 = vsel %vm1435, %v1069, %v1104
        %v1439 = vsel %vm1435, %v1070, %v1106
        %v1440 = vsel %vm1435, %v1071, %v1108
        %v1441 = vsel %vm1435, %v1072, %v1110
        %v1442 = vsel %vm1435, %v1073, %v1112
        %v1443 = vsel %vm1435, %v1074, %v1114
        %v1444 = vsel %vm1435, %v1075, %v1116
        %v1445 = vsel %vm1435, %v1076, %v1118
        %v1446 = vsel %vm1435, %v1077, %v1120
        %v1447 = vsel %vm1435, %v1078, %v1122
        %v1448 = vsel %vm1435, %v1079, %v1124
        %v1449 = vsel %vm1435, %v1080, %v1126
        %v1450 = vsel %vm1435, %v1081, %v1128
        %v1451 = vsel %vm1435, %v1082, %v1130
        %vm1452 = vcmask 261120
        %v1453 = vsel %vm1452, %v1436, %v1148
        %v1454 = vsel %vm1452, %v1437, %v1150
        %v1455 = vsel %vm1452, %v1438, %v1152
        %v1456 = vsel %vm1452, %v1439, %v1154
        %v1457 = vsel %vm1452, %v1440, %v1156
        %v1458 = vsel %vm1452, %v1441, %v1158
        %v1459 = vsel %vm1452, %v1442, %v1160
        %v1460 = vsel %vm1452, %v1443, %v1162
        %v1461 = vsel %vm1452, %v1444, %v1164
        %v1462 = vsel %vm1452, %v1445, %v1166
        %v1463 = vsel %vm1452, %v1446, %v1168
        %v1464 = vsel %vm1452, %v1447, %v1170
        %v1465 = vsel %vm1452, %v1448, %v1172
        %v1466 = vsel %vm1452, %v1449, %v1174
        %v1467 = vsel %vm1452, %v1450, %v1176
        %v1468 = vsel %vm1452, %v1451, %v1178
        %vm1469 = vcmask 392192
        %v1470 = vsel %vm1469, %v1453, %v1196
        %v1471 = vsel %vm1469, %v1454, %v1198
        %v1472 = vsel %vm1469, %v1455, %v1200
        %v1473 = vsel %vm1469, %v1456, %v1202
        %v1474 = vsel %vm1469, %v1457, %v1204
        %v1475 = vsel %vm1469, %v1458, %v1206
        %v1476 = vsel %vm1469, %v1459, %v1208
        %v1477 = vsel %vm1469, %v1460, %v1210
        %v1478 = vsel %vm1469, %v1461, %v1212
        %v1479 = vsel %vm1469, %v1462, %v1214
        %v1480 = vsel %vm1469, %v1463, %v1216
        %v1481 = vsel %vm1469, %v1464, %v1218
        %v1482 = vsel %vm1469, %v1465, %v1220
        %v1483 = vsel %vm1469, %v1466, %v1222
        %v1484 = vsel %vm1469, %v1467, %v1224
        %v1485 = vsel %vm1469, %v1468, %v1226
        %vm1486 = vcmask 523264
        %v1487 = vsel %vm1486, %v1470, %v1244
        %v1488 = vsel %vm1486, %v1471, %v1246
        %v1489 = vsel %vm1486, %v1472, %v1248
        %v1490 = vsel %vm1486, %v1473, %v1250
        %v1491 = vsel %vm1486, %v1474, %v1252
        %v1492 = vsel %vm1486, %v1475, %v1254
        %v1493 = vsel %vm1486, %v1476, %v1256
        %v1494 = vsel %vm1486, %v1477, %v1258
        %v1495 = vsel %vm1486, %v1478, %v1260
        %v1496 = vsel %vm1486, %v1479, %v1262
        %v1497 = vsel %vm1486, %v1480, %v1264
        %v1498 = vsel %vm1486, %v1481, %v1266
        %v1499 = vsel %vm1486, %v1482, %v1268
        %v1500 = vsel %vm1486, %v1483, %v1270
        %v1501 = vsel %vm1486, %v1484, %v1272
        %v1502 = vsel %vm1486, %v1485, %v1274
        %vm1503 = vcmask 654336
        %v1504 = vsel %vm1503, %v1487, %v1292
        %v1505 = vsel %vm1503, %v1488, %v1294
        %v1506 = vsel %vm1503, %v1489, %v1296
        %v1507 = vsel %vm1503, %v1490, %v1298
        %v1508 = vsel %vm1503, %v1491, %v1300
        %v1509 = vsel %vm1503, %v1492, %v1302
        %v1510 = vsel %vm1503, %v1493, %v1304
        %v1511 = vsel %vm1503, %v1494, %v1306
        %v1512 = vsel %vm1503, %v1495, %v1308
        %v1513 = vsel %vm1503, %v1496, %v1310
        %v1514 = vsel %vm1503, %v1497, %v1312
        %v1515 = vsel %vm1503, %v1498, %v1314
        %v1516 = vsel %vm1503, %v1499, %v1316
        %v1517 = vsel %vm1503, %v1500, %v1318
        %v1518 = vsel %vm1503, %v1501, %v1320
        %v1519 = vsel %vm1503, %v1502, %v1322
        %vm1520 = vcmask 785408
        %v1521 = vsel %vm1520, %v1504, %v1340
        %v1522 = vsel %vm1520, %v1505, %v1342
        %v1523 = vsel %vm1520, %v1506, %v1344
        %v1524 = vsel %vm1520, %v1507, %v1346
        %v1525 = vsel %vm1520, %v1508, %v1348
        %v1526 = vsel %vm1520, %v1509, %v1350
        %v1527 = vsel %vm1520, %v1510, %v1352
        %v1528 = vsel %vm1520, %v1511, %v1354
        %v1529 = vsel %vm1520, %v1512, %v1356
        %v1530 = vsel %vm1520, %v1513, %v1358
        %v1531 = vsel %vm1520, %v1514, %v1360
        %v1532 = vsel %vm1520, %v1515, %v1362
        %v1533 = vsel %vm1520, %v1516, %v1364
        %v1534 = vsel %vm1520, %v1517, %v1366
        %v1535 = vsel %vm1520, %v1518, %v1368
        %v1536 = vsel %vm1520, %v1519, %v1370
        %vm1537 = vcmask 916480
        %v1538 = vsel %vm1537, %v1521, %v1388
        %v1539 = vsel %vm1537, %v1522, %v1390
        %v1540 = vsel %vm1537, %v1523, %v1392
        %v1541 = vsel %vm1537, %v1524, %v1394
        %v1542 = vsel %vm1537, %v1525, %v1396
        %v1543 = vsel %vm1537, %v1526, %v1398
        %v1544 = vsel %vm1537, %v1527, %v1400
        %v1545 = vsel %vm1537, %v1528, %v1402
        %v1546 = vsel %vm1537, %v1529, %v1404
        %v1547 = vsel %vm1537, %v1530, %v1406
        %v1548 = vsel %vm1537, %v1531, %v1408
        %v1549 = vsel %vm1537, %v1532, %v1410
        %v1550 = vsel %vm1537, %v1533, %v1412
        %v1551 = vsel %vm1537, %v1534, %v1414
        %v1552 = vsel %vm1537, %v1535, %v1416
        %v1553 = vsel %vm1537, %v1536, %v1418
        %v1554 = vmul.f32 %v1538, %v1003
        %v1555 = vmul.f32 %v1539, %v1004
        %v1556 = vmul.f32 %v1540, %v1005
        %v1557 = vmul.f32 %v1541, %v1006
        %v1558 = vmul.f32 %v1542, %v1007
        %v1559 = vmul.f32 %v1543, %v1008
        %v1560 = vmul.f32 %v1544, %v1009
        %v1561 = vmul.f32 %v1545, %v1010
        %v1562 = vmul.f32 %v1546, %v1011
        %v1563 = vmul.f32 %v1547, %v1012
        %v1564 = vmul.f32 %v1548, %v1013
        %v1565 = vmul.f32 %v1549, %v1014
        %v1566 = vmul.f32 %v1550, %v1015
        %v1567 = vmul.f32 %v1551, %v1016
        %v1568 = vmul.f32 %v1552, %v1017
        %v1569 = vmul.f32 %v1553, %v1018
        %1570 = vmatprep.subr.mxu0 0.0
        %1571 = vmatpush1.msra.mxu0 %v1569
        %1572 = vmatprep.subr.mxu0 0.0
        %1573 = vmatpush1.msra.mxu0 %v1568
        %1574 = vmatprep.subr.mxu0 0.0
        %1575 = vmatpush1.msra.mxu0 %v1567
        %1576 = vmatprep.subr.mxu0 0.0
        %1577 = vmatpush1.msra.mxu0 %v1566
        %1578 = vmatprep.subr.mxu0 0.0
        %1579 = vmatpush1.msra.mxu0 %v1565
        %1580 = vmatprep.subr.mxu0 0.0
        %1581 = vmatpush1.msra.mxu0 %v1564
        %1582 = vmatprep.subr.mxu0 0.0
        %1583 = vmatpush1.msra.mxu0 %v1563
        %1584 = vmatprep.subr.mxu0 0.0
        %1585 = vmatpush1.msra.mxu0 %v1562
        %1586 = vmatprep.subr.mxu0 0.0
        %1587 = vmatpush1.msra.mxu0 %v1561
        %1588 = vmatprep.subr.mxu0 0.0
        %1589 = vmatpush1.msra.mxu0 %v1560
        %1590 = vmatprep.subr.mxu0 0.0
        %1591 = vmatpush1.msra.mxu0 %v1559
        %1592 = vmatprep.subr.mxu0 0.0
        %1593 = vmatpush1.msra.mxu0 %v1558
        %1594 = vmatprep.subr.mxu0 0.0
        %1595 = vmatpush1.msra.mxu0 %v1557
        %1596 = vmatprep.subr.mxu0 0.0
        %1597 = vmatpush1.msra.mxu0 %v1556
        %1598 = vmatprep.subr.mxu0 0.0
        %1599 = vmatpush1.msra.mxu0 %v1555
        %1600 = vmatprep.subr.mxu0 0.0
        %1601 = vmatpush1.msra.mxu0 %v1554
        %1602 = vmatprep.subr.mxu0 0.0
        %1603 = vmatpush2.msra.mxu0 0.0
        %1604 = vmatprep.subr.mxu0 0.0
        %1605 = vmatpush2.msra.mxu0 0.0
        %1606 = vmatprep.subr.mxu0 0.0
        %1607 = vmatpush2.msra.mxu0 0.0
        %1608 = vmatprep.subr.mxu0 0.0
        %1609 = vmatpush2.msra.mxu0 0.0
        %1610 = vmatprep.subr.mxu0 0.0
        %1611 = vmatpush2.msra.mxu0 0.0
        %1612 = vmatprep.subr.mxu0 0.0
        %1613 = vmatpush2.msra.mxu0 0.0
        %1614 = vmatprep.subr.mxu0 0.0
        %1615 = vmatpush2.msra.mxu0 0.0
        %1616 = vmatprep.subr.mxu0 0.0
        %1617 = vmatpush2.msra.mxu0 0.0
        %1618 = vmatprep.subr.mxu0 0.0
        %1619 = vmatpush2.msra.mxu0 0.0
        %1620 = vmatprep.subr.mxu0 0.0
        %1621 = vmatpush2.msra.mxu0 0.0
        %1622 = vmatprep.subr.mxu0 0.0
        %1623 = vmatpush2.msra.mxu0 0.0
        %1624 = vmatprep.subr.mxu0 0.0
        %1625 = vmatpush2.msra.mxu0 0.0
        %1626 = vmatprep.subr.mxu0 0.0
        %1627 = vmatpush2.msra.mxu0 0.0
        %1628 = vmatprep.subr.mxu0 0.0
        %1629 = vmatpush2.msra.mxu0 0.0
        %1630 = vmatprep.subr.mxu0 0.0
        %1631 = vmatpush2.msra.mxu0 0.0
        %1632 = vmatprep.subr.mxu0 0.0
        %1633 = vmatpush2.msra.mxu0 0.0
        %1634 = vmatprep.mubr.f32.mxu0 0.0
        %1635 = vmatmul.mubr.f32.gmra.mxu0 %v799
        %v1636 = vpop.f32.mrf.mxu0
        %v1637 = vadd.f32 0.0, %v1636
        %v1638 = vpop.f32.mrf.mxu0
        %1639 = vmatprep.mubr.f32.mxu0 0.0
        %1640 = vmatmul.mubr.f32.gmra.mxu0 %v804
        %v1641 = vpop.f32.mrf.mxu0
        %v1642 = vadd.f32 0.0, %v1641
        %v1643 = vpop.f32.mrf.mxu0
        %1644 = vdwg.mxu0
        %1645 = vmax.xlane.f32.xlu0 %v1637
        %v1646 = vpop.xlane.xlu0 %1645
        %1647 = vmax.xlane.f32.xlu0 %v1642
        %v1648 = vpop.xlane.xlu0 %1647
        %v1649 = vsub.f32 %v1637, %v1646
        %v1650 = vsub.f32 %v1642, %v1648
        %v1651 = vmul.f32 %v1649, 1.442695
        %v1652 = vpow.pop %v1651
        %v1653 = vmul.f32 %v1650, 1.442695
        %v1654 = vpow.pop %v1653
        %1655 = vmatprep.subr.mxu0 0.0
        %1656 = vmatpush1.msra.mxu0 %v1050
        %1657 = vmatprep.subr.mxu0 0.0
        %1658 = vmatpush1.msra.mxu0 %v1049
        %1659 = vmatprep.subr.mxu0 0.0
        %1660 = vmatpush1.msra.mxu0 %v1048
        %1661 = vmatprep.subr.mxu0 0.0
        %1662 = vmatpush1.msra.mxu0 %v1047
        %1663 = vmatprep.subr.mxu0 0.0
        %1664 = vmatpush1.msra.mxu0 %v1046
        %1665 = vmatprep.subr.mxu0 0.0
        %1666 = vmatpush1.msra.mxu0 %v1045
        %1667 = vmatprep.subr.mxu0 0.0
        %1668 = vmatpush1.msra.mxu0 %v1044
        %1669 = vmatprep.subr.mxu0 0.0
        %1670 = vmatpush1.msra.mxu0 %v1043
        %1671 = vmatprep.subr.mxu0 0.0
        %1672 = vmatpush1.msra.mxu0 %v1042
        %1673 = vmatprep.subr.mxu0 0.0
        %1674 = vmatpush1.msra.mxu0 %v1041
        %1675 = vmatprep.subr.mxu0 0.0
        %1676 = vmatpush1.msra.mxu0 %v1040
        %1677 = vmatprep.subr.mxu0 0.0
        %1678 = vmatpush1.msra.mxu0 %v1039
        %1679 = vmatprep.subr.mxu0 0.0
        %1680 = vmatpush1.msra.mxu0 %v1038
        %1681 = vmatprep.subr.mxu0 0.0
        %1682 = vmatpush1.msra.mxu0 %v1037
        %1683 = vmatprep.subr.mxu0 0.0
        %1684 = vmatpush1.msra.mxu0 %v1036
        %1685 = vmatprep.subr.mxu0 0.0
        %1686 = vmatpush1.msra.mxu0 %v1035
        %1687 = vmatprep.subr.mxu0 0.0
        %1688 = vmatpush2.msra.mxu0 0.0
        %1689 = vmatprep.subr.mxu0 0.0
        %1690 = vmatpush2.msra.mxu0 0.0
        %1691 = vmatprep.subr.mxu0 0.0
        %1692 = vmatpush2.msra.mxu0 0.0
        %1693 = vmatprep.subr.mxu0 0.0
        %1694 = vmatpush2.msra.mxu0 0.0
        %1695 = vmatprep.subr.mxu0 0.0
        %1696 = vmatpush2.msra.mxu0 0.0
        %1697 = vmatprep.subr.mxu0 0.0
        %1698 = vmatpush2.msra.mxu0 0.0
        %1699 = vmatprep.subr.mxu0 0.0
        %1700 = vmatpush2.msra.mxu0 0.0
        %1701 = vmatprep.subr.mxu0 0.0
        %1702 = vmatpush2.msra.mxu0 0.0
        %1703 = vmatprep.subr.mxu0 0.0
        %1704 = vmatpush2.msra.mxu0 0.0
        %1705 = vmatprep.subr.mxu0 0.0
        %1706 = vmatpush2.msra.mxu0 0.0
        %1707 = vmatprep.subr.mxu0 0.0
        %1708 = vmatpush2.msra.mxu0 0.0
        %1709 = vmatprep.subr.mxu0 0.0
        %1710 = vmatpush2.msra.mxu0 0.0
        %1711 = vmatprep.subr.mxu0 0.0
        %1712 = vmatpush2.msra.mxu0 0.0
        %1713 = vmatprep.subr.mxu0 0.0
        %1714 = vmatpush2.msra.mxu0 0.0
        %1715 = vmatprep.subr.mxu0 0.0
        %1716 = vmatpush2.msra.mxu0 0.0
        %1717 = vmatprep.subr.mxu0 0.0
        %1718 = vmatpush2.msra.mxu0 0.0
        %1719 = vmatprep.mubr.f32.mxu0 0.0
        %1720 = vmatmul.mubr.f32.gmra.mxu0 %v1652
        %v1721 = vpop.f32.mrf.mxu0
        %v1722 = vadd.f32 0.0, %v1721
        %v1723 = vpop.f32.mrf.mxu0
        %1724 = vmatprep.mubr.f32.mxu0 0.0
        %1725 = vmatmul.mubr.f32.gmra.mxu0 %v1654
        %v1726 = vpop.f32.mrf.mxu0
        %v1727 = vadd.f32 0.0, %v1726
        %v1728 = vpop.f32.mrf.mxu0
        %1729 = vdwg.mxu0
        %v1730 = vrcp.pop %v1722
        %v1731 = vrcp.pop %v1727
        %v1732 = vmul.f32 %v1652, %v1730
        %v1733 = vmul.f32 %v1654, %v1731
        %1734 = vst [vmem:[%s702] sm:$0xff] %v1732
        %1735 = vst [vmem:[%s702 + $0x8] sm:$0xff] %v1733
        %v1736 = vmul.f32 %v995, %v1019
        %v1737 = vmul.f32 %v1000, %v1020
        %v1738 = vmul.f32 %v995, %v1021
        %v1739 = vmul.f32 %v1000, %v1022
        %v1740 = vmul.f32 %v995, %v1023
        %v1741 = vmul.f32 %v1000, %v1024
        %v1742 = vmul.f32 %v995, %v1025
        %v1743 = vmul.f32 %v1000, %v1026
        %v1744 = vmul.f32 %v995, %v1027
        %v1745 = vmul.f32 %v1000, %v1028
        %v1746 = vmul.f32 %v995, %v1029
        %v1747 = vmul.f32 %v1000, %v1030
        %v1748 = vmul.f32 %v995, %v1031
        %v1749 = vmul.f32 %v1000, %v1032
        %v1750 = vmul.f32 %v995, %v1033
        %v1751 = vmul.f32 %v1000, %v1034
        %1752 = vmatprep.subr.mxu0 0.0
        %1753 = vmatpush1.msra.mxu0 %v1751
        %1754 = vmatprep.subr.mxu0 0.0
        %1755 = vmatpush1.msra.mxu0 %v1750
        %1756 = vmatprep.subr.mxu0 0.0
        %1757 = vmatpush1.msra.mxu0 %v1749
        %1758 = vmatprep.subr.mxu0 0.0
        %1759 = vmatpush1.msra.mxu0 %v1748
        %1760 = vmatprep.subr.mxu0 0.0
        %1761 = vmatpush1.msra.mxu0 %v1747
        %1762 = vmatprep.subr.mxu0 0.0
        %1763 = vmatpush1.msra.mxu0 %v1746
        %1764 = vmatprep.subr.mxu0 0.0
        %1765 = vmatpush1.msra.mxu0 %v1745
        %1766 = vmatprep.subr.mxu0 0.0
        %1767 = vmatpush1.msra.mxu0 %v1744
        %1768 = vmatprep.subr.mxu0 0.0
        %1769 = vmatpush1.msra.mxu0 %v1743
        %1770 = vmatprep.subr.mxu0 0.0
        %1771 = vmatpush1.msra.mxu0 %v1742
        %1772 = vmatprep.subr.mxu0 0.0
        %1773 = vmatpush1.msra.mxu0 %v1741
        %1774 = vmatprep.subr.mxu0 0.0
        %1775 = vmatpush1.msra.mxu0 %v1740
        %1776 = vmatprep.subr.mxu0 0.0
        %1777 = vmatpush1.msra.mxu0 %v1739
        %1778 = vmatprep.subr.mxu0 0.0
        %1779 = vmatpush1.msra.mxu0 %v1738
        %1780 = vmatprep.subr.mxu0 0.0
        %1781 = vmatpush1.msra.mxu0 %v1737
        %1782 = vmatprep.subr.mxu0 0.0
        %1783 = vmatpush1.msra.mxu0 %v1736
        %1784 = vmatprep.subr.mxu0 0.0
        %1785 = vmatpush2.msra.mxu0 0.0
        %1786 = vmatprep.subr.mxu0 0.0
        %1787 = vmatpush2.msra.mxu0 0.0
        %1788 = vmatprep.subr.mxu0 0.0
        %1789 = vmatpush2.msra.mxu0 0.0
        %1790 = vmatprep.subr.mxu0 0.0
        %1791 = vmatpush2.msra.mxu0 0.0
        %1792 = vmatprep.subr.mxu0 0.0
        %1793 = vmatpush2.msra.mxu0 0.0
        %1794 = vmatprep.subr.mxu0 0.0
        %1795 = vmatpush2.msra.mxu0 0.0
        %1796 = vmatprep.subr.mxu0 0.0
        %1797 = vmatpush2.msra.mxu0 0.0
        %1798 = vmatprep.subr.mxu0 0.0
        %1799 = vmatpush2.msra.mxu0 0.0
        %1800 = vmatprep.subr.mxu0 0.0
        %1801 = vmatpush2.msra.mxu0 0.0
        %1802 = vmatprep.subr.mxu0 0.0
        %1803 = vmatpush2.msra.mxu0 0.0
        %1804 = vmatprep.subr.mxu0 0.0
        %1805 = vmatpush2.msra.mxu0 0.0
        %1806 = vmatprep.subr.mxu0 0.0
        %1807 = vmatpush2.msra.mxu0 0.0
        %1808 = vmatprep.subr.mxu0 0.0
        %1809 = vmatpush2.msra.mxu0 0.0
        %1810 = vmatprep.subr.mxu0 0.0
        %1811 = vmatpush2.msra.mxu0 0.0
        %1812 = vmatprep.subr.mxu0 0.0
        %1813 = vmatpush2.msra.mxu0 0.0
        %1814 = vmatprep.subr.mxu0 0.0
        %1815 = vmatpush2.msra.mxu0 0.0
        %1816 = vmatprep.mubr.f32.mxu0 0.0
        %1817 = vmatmul.mubr.f32.gmra.mxu0 %v1732
        %v1818 = vpop.f32.mrf.mxu0
        %v1819 = vadd.f32 0.0, %v1818
        %v1820 = vpop.f32.mrf.mxu0
        %1821 = vmatprep.mubr.f32.mxu0 0.0
        %1822 = vmatmul.mubr.f32.gmra.mxu0 %v1733
        %v1823 = vpop.f32.mrf.mxu0
        %v1824 = vadd.f32 0.0, %v1823
        %v1825 = vpop.f32.mrf.mxu0
        %1826 = vdwg.mxu0
        %v1827 = vld [vmem:[#allocation13] sm:$0xff]
        %v1828 = vld [vmem:[#allocation13 + $0x8] sm:$0xff]
        %v1829 = vld [vmem:[#allocation13 + $0x10] sm:$0xff]
        %v1830 = vld [vmem:[#allocation13 + $0x18] sm:$0xff]
        %v1831 = vld [vmem:[#allocation13 + $0x20] sm:$0xff]
        %v1832 = vld [vmem:[#allocation13 + $0x28] sm:$0xff]
        %v1833 = vld [vmem:[#allocation13 + $0x30] sm:$0xff]
        %v1834 = vld [vmem:[#allocation13 + $0x38] sm:$0xff]
        %v1835 = vld [vmem:[#allocation13 + $0x40] sm:$0xff]
        %v1836 = vld [vmem:[#allocation13 + $0x48] sm:$0xff]
        %v1837 = vld [vmem:[#allocation13 + $0x50] sm:$0xff]
        %v1838 = vld [vmem:[#allocation13 + $0x58] sm:$0xff]
        %v1839 = vld [vmem:[#allocation13 + $0x60] sm:$0xff]
        %v1840 = vld [vmem:[#allocation13 + $0x68] sm:$0xff]
        %v1841 = vld [vmem:[#allocation13 + $0x70] sm:$0xff]
        %v1842 = vld [vmem:[#allocation13 + $0x78] sm:$0xff]
        %v1843 = vld [vmem:[%s10] sm:$0x1]
        %v1845 = vlaneseq
        %v1846 = vshrl.u32 %v1845, 7
        %v1847 = vsub.s32 0, %v1846
        %v1848 = vrot.slane %v1843, %v1847
        %1850 = vmatprep.subr.mxu0 0.0
        %1851 = vmatpush1.msra.mxu0 %v1842
        %1852 = vmatprep.subr.mxu0 0.0
        %1853 = vmatpush1.msra.mxu0 %v1841
        %1854 = vmatprep.subr.mxu0 0.0
        %1855 = vmatpush1.msra.mxu0 %v1840
        %1856 = vmatprep.subr.mxu0 0.0
        %1857 = vmatpush1.msra.mxu0 %v1839
        %1858 = vmatprep.subr.mxu0 0.0
        %1859 = vmatpush1.msra.mxu0 %v1838
        %1860 = vmatprep.subr.mxu0 0.0
        %1861 = vmatpush1.msra.mxu0 %v1837
        %1862 = vmatprep.subr.mxu0 0.0
        %1863 = vmatpush1.msra.mxu0 %v1836
        %1864 = vmatprep.subr.mxu0 0.0
        %1865 = vmatpush1.msra.mxu0 %v1835
        %1866 = vmatprep.subr.mxu0 0.0
        %1867 = vmatpush1.msra.mxu0 %v1834
        %1868 = vmatprep.subr.mxu0 0.0
        %1869 = vmatpush1.msra.mxu0 %v1833
        %1870 = vmatprep.subr.mxu0 0.0
        %1871 = vmatpush1.msra.mxu0 %v1832
        %1872 = vmatprep.subr.mxu0 0.0
        %1873 = vmatpush1.msra.mxu0 %v1831
        %1874 = vmatprep.subr.mxu0 0.0
        %1875 = vmatpush1.msra.mxu0 %v1830
        %1876 = vmatprep.subr.mxu0 0.0
        %1877 = vmatpush1.msra.mxu0 %v1829
        %1878 = vmatprep.subr.mxu0 0.0
        %1879 = vmatpush1.msra.mxu0 %v1828
        %1880 = vmatprep.subr.mxu0 0.0
        %1881 = vmatpush1.msra.mxu0 %v1827
        %1882 = vmatprep.subr.mxu0 0.0
        %1883 = vmatpush2.msra.mxu0 0.0
        %1884 = vmatprep.subr.mxu0 0.0
        %1885 = vmatpush2.msra.mxu0 0.0
        %1886 = vmatprep.subr.mxu0 0.0
        %1887 = vmatpush2.msra.mxu0 0.0
        %1888 = vmatprep.subr.mxu0 0.0
        %1889 = vmatpush2.msra.mxu0 0.0
        %1890 = vmatprep.subr.mxu0 0.0
        %1891 = vmatpush2.msra.mxu0 0.0
        %1892 = vmatprep.subr.mxu0 0.0
        %1893 = vmatpush2.msra.mxu0 0.0
        %1894 = vmatprep.subr.mxu0 0.0
        %1895 = vmatpush2.msra.mxu0 0.0
        %1896 = vmatprep.subr.mxu0 0.0
        %1897 = vmatpush2.msra.mxu0 0.0
        %1898 = vmatprep.subr.mxu0 0.0
        %1899 = vmatpush2.msra.mxu0 0.0
        %1900 = vmatprep.subr.mxu0 0.0
        %1901 = vmatpush2.msra.mxu0 0.0
        %1902 = vmatprep.subr.mxu0 0.0
        %1903 = vmatpush2.msra.mxu0 0.0
        %1904 = vmatprep.subr.mxu0 0.0
        %1905 = vmatpush2.msra.mxu0 0.0
        %1906 = vmatprep.subr.mxu0 0.0
        %1907 = vmatpush2.msra.mxu0 0.0
        %1908 = vmatprep.subr.mxu0 0.0
        %1909 = vmatpush2.msra.mxu0 0.0
        %1910 = vmatprep.subr.mxu0 0.0
        %1911 = vmatpush2.msra.mxu0 0.0
        %1912 = vmatprep.subr.mxu0 0.0
        %1913 = vmatpush2.msra.mxu0 0.0
        %1914 = vmatprep.mubr.f32.mxu0 0.0
        %1915 = vmatmul.mubr.f32.gmra.mxu0 %v1819
        %v1916 = vpop.f32.mrf.mxu0
        %v1917 = vadd.f32 %v1848, %v1916
        %v1918 = vpop.f32.mrf.mxu0
        %1919 = vmatprep.mubr.f32.mxu0 0.0
        %1920 = vmatmul.mubr.f32.gmra.mxu0 %v1824
        %v1921 = vpop.f32.mrf.mxu0
        %v1922 = vadd.f32 %v1848, %v1921
        %v1923 = vpop.f32.mrf.mxu0
        %1924 = vdwg.mxu0
        %1925 = vst [vmem:[%s695] sm:$0xff] %v1917
        %1926 = vst [vmem:[%s695 + $0x8] sm:$0xff] %v1922
        %s1927 = sand.u32 %s360, 1
        %s1928 = scalar_lea.sflag [#allocation4], %s1927
        %s1929 = sand.u32 %s360, 1
        %s1930 = smul.addr %s1929, 16
        %s1931 = scalar_lea.vmem [#allocation19], %s1930
        %s1932 = sand.u32 %s386, 1
        %s1933 = scalar_lea.sflag [#allocation21], %s1932
        %s1934 = sand.u32 %s386, 1
        %s1935 = smul.addr %s1934, 16
        %s1936 = scalar_lea.vmem [#allocation20], %s1935
        // Predicated region
        $region117: #{tpu_custom_call.1} parent=75 // pred_check
          %p1937 = pneg %p370
        $region118: #{tpu_custom_call.1} parent=75 // pred_check_branch
          %1939 = sbr.rel (%p1937) target = $region120
        $region119: #{tpu_custom_call.1} parent=75 // pred_region
          %s1941 = ssub.s32 256, 256
          %1942 = vsyncadd %s1928, %s1941
          %s1943 = smul.addr %s43, 2
          %s1944 = smul.addr %s1943, 128
          %s1945 = scalar_lea.hbm %s14, %s1944
          %s1946 = sshll.u32 %s1931, 4
          %s1947 = int_to_ptr.vmem [resolvable:$true] %s1946
          %1952 = dma.vmem_to_hbm [thread:$0]  %s1947, 256, %s1945, %s1928, 128, 128, 8
        $region120: #{tpu_custom_call.1} parent=75 // pred_fallthru
          _
        // Predicated region
        $region121: #{tpu_custom_call.1} parent=75 // pred_check
          %p1953 = pneg %p396
        $region122: #{tpu_custom_call.1} parent=75 // pred_check_branch
          %1955 = sbr.rel (%p1953) target = $region124
        $region123: #{tpu_custom_call.1} parent=75 // pred_region
          %s1957 = ssub.s32 256, 256
          %1958 = vsyncadd %s1933, %s1957
          %s1959 = smul.addr %s43, 2
          %s1960 = smul.addr %s1959, 128
          %s1961 = scalar_lea.hbm %s15, %s1960
          %s1962 = sshll.u32 %s1936, 4
          %s1963 = int_to_ptr.vmem [resolvable:$true] %s1962
          %1968 = dma.vmem_to_hbm [thread:$0]  %s1963, 256, %s1961, %s1933, 128, 128, 8
        $region124: #{tpu_custom_call.1} parent=75 // pred_fallthru
          _
      $region76: #{tpu_custom_call.1} parent=5 // pred_fallthru
        _
      %p1969 = scmp.le.s32.totalorder 2, %s38
      // Predicated region
      $region125: #{tpu_custom_call.1} parent=5 // pred_check
        %p1970 = pneg %p1969
      $region126: #{tpu_custom_call.1} parent=5 // pred_check_branch
        %1972 = sbr.rel (%p1970) target = $region128
      $region127: #{tpu_custom_call.1} parent=5 // pred_region
        %s1973 = ssub.s32 %s38, 2
        // Predicated region
        $region129: #{tpu_custom_call.1} parent=127 // pred_check
          %p1974 = pneg %p376
        $region130: #{tpu_custom_call.1} parent=127 // pred_check_branch
          %1976 = sbr.rel (%p1974) target = $region132
        $region131: #{tpu_custom_call.1} parent=127 // pred_region
          %s1977 = sand.u32 %s361, 1
          %s1978 = scalar_lea.sflag [#allocation4], %s1977
          %s1979 = sand.u32 %s361, 1
          %s1980 = smul.addr %s1979, 16
          %s1981 = scalar_lea.vmem [#allocation19], %s1980
          %1982 = dma.done %s1978, 256
        $region132: #{tpu_custom_call.1} parent=127 // pred_fallthru
          _
        // Predicated region
        $region133: #{tpu_custom_call.1} parent=127 // pred_check
          %p1983 = pneg %p402
        $region134: #{tpu_custom_call.1} parent=127 // pred_check_branch
          %1985 = sbr.rel (%p1983) target = $region136
        $region135: #{tpu_custom_call.1} parent=127 // pred_region
          %s1986 = sand.u32 %s387, 1
          %s1987 = scalar_lea.sflag [#allocation21], %s1986
          %s1988 = sand.u32 %s387, 1
          %s1989 = smul.addr %s1988, 16
          %s1990 = scalar_lea.vmem [#allocation20], %s1989
          %1991 = dma.done %s1987, 256
        $region136: #{tpu_custom_call.1} parent=127 // pred_fallthru
          _
      $region128: #{tpu_custom_call.1} parent=5 // pred_fallthru
        _
    $region6: #{tpu_custom_call.1} parent=1 // loop_footer
      %s42 = sadd.s32 1, %s38
    $region7: #{tpu_custom_call.1} parent=1 // loop_footer_branch
      %37 = sbr.rel target = $region3
    $region8: #{tpu_custom_call.1} parent=1 // loop_exit
      _
    %1992 = vsyncpa [#allocation3], 1
    %s1993 = scalar_lea.sflag [#allocation3], 1
    %1994 = vsyncpa %s1993, 1
    %1995 = vsyncpa [#allocation6], 1
    %s1996 = scalar_lea.sflag [#allocation6], 1
    %1997 = vsyncpa %s1996, 1
    %1998 = vsyncpa [#allocation9], 1
    %1999 = vsyncpa [#allocation12], 1
    %2000 = vsyncpa [#allocation15], 1
    %2001 = vsyncpa [#allocation18], 1
    %2002 = vsyncpa [#allocation4], 1
    %s2003 = scalar_lea.sflag [#allocation4], 1
    %2004 = vsyncpa %s2003, 1
    %2005 = vsyncpa [#allocation21], 1
    %s2006 = scalar_lea.sflag [#allocation21], 1
    %2007 = vsyncpa %s2006, 1

</llo_original>
